<compile_context>
chip_gen: v7x
topology: tpu7x:2x2x1
jax: 0.10.0
libtpu: 0.0.40
codegen_flags: <defaults>
</compile_context>

<pallas_src>
import functools

import jax
import jax.numpy as jnp
from jax.experimental import pallas as pl
from jax.experimental.pallas import tpu as pltpu

# ---------------- synthetic, self-consistent config ----------------
CFG = dict(
    batch_size=2,
    seq_len=4,            # time steps fed to convlstm1
    input_chans=2,
    kernel_size=8,        # first spatial dim (H) of convlstm1
    n_freq=16,            # second spatial dim (W) of convlstm1
    filter_size1=3,
    filter_size2=3,
    filter_size3=(2, 4),
    num_features1=8,
    num_features2=8,
    num_features3=16,
    num_features4=16,
    pooling_size=2,
    n_note=12,
    padding_mode="same",
    peephole=False,
    Layer_norm=False,
)

# Set to jnp.bfloat16 on v6e/v7x for full MXU rate (f32 accumulation kept);
# default f32 for exact numerical parity with the f32 reference math.
MATMUL_DTYPE = jnp.float32


def _mm(a, b):
    if MATMUL_DTYPE != jnp.float32:
        a = a.astype(MATMUL_DTYPE)
        b = b.astype(MATMUL_DTYPE)
    return jnp.dot(a, b, preferred_element_type=jnp.float32)


def _elu(x):
    return jnp.where(x > 0, x, jnp.exp(jnp.minimum(x, 0.0)) - 1.0)


def _shift_lanes(v, off):
    """out[:, k] = v[:, k + off], zero-filled outside [0, HW). Lowers to lane rotates."""
    if off == 0:
        return v
    f, _ = v.shape
    z = jnp.zeros((f, abs(off)), v.dtype)
    if off > 0:
        return jnp.concatenate([v[:, off:], z], axis=-1)
    return jnp.concatenate([z, v[:, :off]], axis=-1)


# ---------------- Pallas kernels ----------------
def _clstm_layer_kernel(xcolT_ref, wxT_ref, whT_ref, b_ref,   # inputs
                        hseq_ref,                              # output
                        *, T, H, W, F, K):
    """Full ConvLSTM layer for one batch element; grid = (B,), time unrolled in-kernel.

    xcolT: (1, K*K*Cin, T*H*W)  transposed im2col'ed input sequence (this batch elem)
    wxT:   (4F, K*K*Cin)        fused input-path gate weights   [i|f|o|g] rows
    whT:   (4F, K*K*F)          fused recurrent-path gate weights
    b:     (4F, 1)              fused gate bias
    hseq:  (1, T, F, H*W)       hidden states, lane-dense (H*W in the lane dim)
    """
    HW = H * W
    pad = K // 2

    # Constant W-boundary index (hoisted out of the time loop; computed once).
    w_idx = jax.lax.broadcasted_iota(jnp.int32, (F, HW), 1) % W

    # Input-path projection for all T timesteps: one MXU matmul (+ bias).
    ax = _mm(wxT_ref[...], xcolT_ref[0]) + b_ref[...]          # (4F, T*HW)

    h = jnp.zeros((F, HW), jnp.float32)
    c = jnp.zeros((F, HW), jnp.float32)

    for t in range(T):                      # trace-time unrolled (T is 2 or 4)
        a = ax[:, t * HW:(t + 1) * HW]      # (4F, HW)
        if t > 0:                           # h == 0 at t == 0 -> skip recurrent path
            # im2col of h via lane shifts + boundary masks ('same' zero padding).
            pieces = []
            for di in range(K):
                for dj in range(K):
                    dio, djo = di - pad, dj - pad
                    p = _shift_lanes(h, dio * W + djo)
                    if djo > 0:
                        p = jnp.where(w_idx < W - djo, p, 0.0)
                    elif djo < 0:
                        p = jnp.where(w_idx >= -djo, p, 0.0)
                    pieces.append(p)
            hstack = jnp.concatenate(pieces, axis=0)            # (K*K*F, HW)
            a = a + _mm(whT_ref[...], hstack)

        # Gates [i|f|o|g]; sigmoid(x) = 0.5*tanh(x/2) + 0.5 (tanh-only activations).
        t_ifo = jnp.tanh(0.5 * a[:3 * F, :])
        i_s = 0.5 * t_ifo[0:F] + 0.5
        f_s = 0.5 * t_ifo[F:2 * F] + 0.5
        o_s = 0.5 * t_ifo[2 * F:3 * F] + 0.5
        g_t = jnp.tanh(a[3 * F:4 * F, :])

        c = f_s * c + i_s * g_t
        h = o_s * jnp.tanh(c)
        hseq_ref[0, t] = h                                      # lane-dense store


def _head_kernel(x_ref, w3_ref, b3_ref, w4_ref, b4_ref, w5_ref, b5_ref, o_ref):
    # conv3(full-spatial kernel) + ELU -> conv4(1x1) + ELU -> conv5(1x1), as matmuls
    h = _elu(_mm(x_ref[...], w3_ref[...]) + b3_ref[...])
    h = _elu(_mm(h, w4_ref[...]) + b4_ref[...])
    o_ref[...] = _mm(h, w5_ref[...]) + b5_ref[...]


# ---------------- wrappers / glue ----------------
def _im2colT_same_seq(x, K):
    # x: (B, T, H, W, C) -> (B, K*K*C, T*H*W), 'same' padding, patch order (di, dj, c).
    # Done ONCE per layer for the whole sequence (wrapper-side XLA, tiny data).
    B, T, H, W, C = x.shape
    p = K // 2
    xp = jnp.pad(x, ((0, 0), (0, 0), (p, p), (p, p), (0, 0)))
    cols = [xp[:, :, di:di + H, dj:dj + W, :] for di in range(K) for dj in range(K)]
    col = jnp.concatenate(cols, axis=-1).reshape(B, T * H * W, K * K * C)
    return jnp.transpose(col, (0, 2, 1))


def convlstm_layer(x, params, num_features, K):
    # x: (B, T, H, W, Cin) channels-last -> hidden states (B, T, F, H*W), lane-dense.
    B, T, H, W, Cin = x.shape
    F = num_features
    HW = H * W
    Px, Ph = K * K * Cin, K * K * F

    xcolT = _im2colT_same_seq(x, K)                    # (B, Px, T*HW)
    wxT = jnp.transpose(params["wx"])                  # (4F, Px)
    whT = jnp.transpose(params["wh"])                  # (4F, Ph)
    bT = jnp.transpose(params["b"])                    # (4F, 1)

    kernel = functools.partial(_clstm_layer_kernel, T=T, H=H, W=W, F=F, K=K)
    hseq = pl.pallas_call(
        kernel,
        out_shape=jax.ShapeDtypeStruct((B, T, F, HW), jnp.float32),
        grid=(B,),
        in_specs=[
            pl.BlockSpec((1, Px, T * HW), lambda b: (b, 0, 0)),   # per-batch block
            pl.BlockSpec((4 * F, Px), lambda b: (0, 0)),
            pl.BlockSpec((4 * F, Ph), lambda b: (0, 0)),
            pl.BlockSpec((4 * F, 1), lambda b: (0, 0)),
        ],
        out_specs=pl.BlockSpec((1, T, F, HW), lambda b: (b, 0, 0, 0)),
        compiler_params=pltpu.CompilerParams(
            dimension_semantics=("parallel",)),        # B=2 -> both TCs on v7x
    )(xcolT, wxT, whT, bT)
    return hseq


def maxpool3d_2_tfhw(x):
    # MaxPool3d(kernel=2, stride=2) over (T, H, W) of a (B, T, F, H, W) tensor;
    # jnp.maximum tree, XLA fuses it (tiny data).
    B, T, F, H, W = x.shape
    xr = x.reshape(B, T // 2, 2, F, H // 2, 2, W // 2, 2)
    return xr.max(axis=(2, 5, 7))                      # (B, T/2, F, H/2, W/2)


def net_forward(x_ncdhw, params, cfg):
    B = cfg["batch_size"]
    F1, F2 = cfg["num_features1"], cfg["num_features2"]
    # NCDHW -> channels-last
    x = jnp.transpose(x_ncdhw, (0, 2, 3, 4, 1)).astype(jnp.float32)   # (B,T,H,W,Cin)
    _, T, H, W, _ = x.shape

    h1 = convlstm_layer(x, params["lstm1"], F1, cfg["filter_size1"])  # (B,T,F1,HW)
    p1 = maxpool3d_2_tfhw(h1.reshape(B, T, F1, H, W))                 # (B,T2,F1,H2,W2)

    x2 = jnp.transpose(p1, (0, 1, 3, 4, 2))                           # channels-last
    h2 = convlstm_layer(x2, params["lstm2"], F2, cfg["filter_size2"])  # (B,T2,F2,H2W2)
    T2, H2, W2 = p1.shape[1], p1.shape[3], p1.shape[4]
    p2 = maxpool3d_2_tfhw(h2.reshape(B, T2, F2, H2, W2))              # (B,T3,F2,H3,W3)

    # PyTorch: x.view(B, num_features2, -1, filter_size3[1]) on the NCDHW tensor.
    x3 = jnp.transpose(p2, (0, 2, 1, 3, 4)).reshape(
        B, F2, -1, cfg["filter_size3"][1])
    assert x3.shape[2] == cfg["filter_size3"][0], "conv3 kernel must match spatial extent"
    xflat = x3.reshape(B, -1)   # flatten order (c, i, j) == Conv2d weight contraction order

    out = pl.pallas_call(
        _head_kernel,
        out_shape=jax.ShapeDtypeStruct((B, cfg["n_note"]), jnp.float32),
        in_specs=[pl.BlockSpec(memory_space=pltpu.MemorySpace.VMEM)] * 7,
        out_specs=pl.BlockSpec(memory_space=pltpu.MemorySpace.VMEM),
    )(xflat, params["w3"], params["b3"], params["w4"], params["b4"],
      params["w5"], params["b5"])
    return out.reshape(B, cfg["n_note"], 1, 1)


# ---------------- deterministic parameter init ----------------
def init_params(key, cfg):
    ks = jax.random.split(key, 8)

    def nrm(k, shape, scale=0.1):
        return (scale * jax.random.normal(k, shape)).astype(jnp.float32)

    def lstm_params(k, cin, cf, K):
        kk = jax.random.split(k, 2)
        # fused gate layout along the last dim: [i | f | o | g]; forget bias = 1
        b = jnp.concatenate(
            [jnp.zeros((1, cf)), jnp.ones((1, cf)),
             jnp.zeros((1, cf)), jnp.zeros((1, cf))], axis=1).astype(jnp.float32)
        return dict(wx=nrm(kk[0], (K * K * cin, 4 * cf)),
                    wh=nrm(kk[1], (K * K * cf, 4 * cf)),
                    b=b)

    f1, f2 = cfg["num_features1"], cfg["num_features2"]
    f3, f4 = cfg["num_features3"], cfg["num_features4"]
    F_head = f2 * cfg["filter_size3"][0] * cfg["filter_size3"][1]
    return dict(
        lstm1=lstm_params(ks[0], cfg["input_chans"], f1, cfg["filter_size1"]),
        lstm2=lstm_params(ks[1], f1, f2, cfg["filter_size2"]),
        w3=nrm(ks[2], (F_head, f3)), b3=jnp.zeros((1, f3), jnp.float32),
        w4=nrm(ks[3], (f3, f4)), b4=jnp.zeros((1, f4), jnp.float32),
        w5=nrm(ks[4], (f4, cfg["n_note"])), b5=jnp.zeros((1, cfg["n_note"]), jnp.float32),
    )


if __name__ == "__main__":
    cfg = CFG
    key = jax.random.PRNGKey(0)
    kx, kp = jax.random.split(key)
    x = jax.random.normal(
        kx, (cfg["batch_size"], cfg["input_chans"], cfg["seq_len"],
             cfg["kernel_size"], cfg["n_freq"]), jnp.float32)
    params = init_params(kp, cfg)

    fwd = jax.jit(functools.partial(net_forward, cfg=cfg))
    out = fwd(x, params)
    jax.block_until_ready(out)
    assert out.shape == (cfg["batch_size"], cfg["n_note"], 1, 1), out.shape
    assert out.dtype == jnp.float32
    assert bool(jnp.all(jnp.isfinite(out)))
    print("KERNEL_OK")
</pallas_src>

<mosaic_0001>
module attributes {stable_mosaic.version = 11 : i64} {
  func.func @_clstm_layer_kernel(%arg0: i32, %arg1: memref<1x18x512xf32, #tpu.memory_space<vmem>>, %arg2: memref<32x18xf32, #tpu.memory_space<vmem>>, %arg3: memref<32x72xf32, #tpu.memory_space<vmem>>, %arg4: memref<32x1xf32, #tpu.memory_space<vmem>>, %arg5: memref<1x4x8x128xf32, #tpu.memory_space<vmem>>) attributes {dimension_semantics = [#tpu.dimension_semantics<parallel>], iteration_bounds = array<i64: 2>, scalar_prefetch = 0 : i64, scratch_operands = 0 : i64, tpu.core_type = #tpu.core_type<tc>, window_params = [{transform_indices = @transform_0, window_bounds = array<i64: 1, 18, 512>}, {pipeline_mode = #tpu.pipeline_mode<synchronous>, transform_indices = @transform_1, window_bounds = array<i64: 32, 18>}, {pipeline_mode = #tpu.pipeline_mode<synchronous>, transform_indices = @transform_2, window_bounds = array<i64: 32, 72>}, {pipeline_mode = #tpu.pipeline_mode<synchronous>, transform_indices = @transform_3, window_bounds = array<i64: 32, 1>}, {transform_indices = @transform_4, window_bounds = array<i64: 1, 4, 8, 128>}]} {
    %0 = tpu.iota {dimensions = array<i32: 1>} : vector<8x128xi32>
    %c16_i32 = arith.constant 16 : i32
    %c0_i32 = arith.constant 0 : i32
    %1 = arith.cmpi eq, %c16_i32, %c0_i32 : i32
    %c1_i32 = arith.constant 1 : i32
    %2 = arith.select %1, %c1_i32, %c16_i32 : i32
    %3 = vector.broadcast %2 : i32 to vector<8x128xi32>
    %4 = arith.remsi %0, %3 : vector<8x128xi32>
    %c0_i32_0 = arith.constant 0 : i32
    %5 = vector.broadcast %c0_i32_0 : i32 to vector<8x128xi32>
    %6 = arith.cmpi ne, %4, %5 : vector<8x128xi32>
    %c0_i32_1 = arith.constant 0 : i32
    %7 = vector.broadcast %c0_i32_1 : i32 to vector<8x128xi32>
    %8 = arith.cmpi slt, %4, %7 : vector<8x128xi32>
    %c0_i32_2 = arith.constant 0 : i32
    %9 = arith.cmpi slt, %2, %c0_i32_2 : i32
    %10 = vector.broadcast %9 : i1 to vector<8x128xi1>
    %11 = vector.broadcast %10 : vector<8x128xi1> to vector<8x128xi1>
    %12 = arith.xori %8, %11 : vector<8x128xi1>
    %13 = arith.andi %12, %6 : vector<8x128xi1>
    %14 = vector.broadcast %2 : i32 to vector<8x128xi32>
    %15 = arith.addi %4, %14 : vector<8x128xi32>
    %16 = arith.select %13, %15, %4 : vector<8x128xi1>, vector<8x128xi32>
    %c0 = arith.constant 0 : index
    %c0_3 = arith.constant 0 : index
    %17 = vector.load %arg2[%c0, %c0_3] : memref<32x18xf32, #tpu.memory_space<vmem>>, vector<32x18xf32>
    %c0_4 = arith.constant 0 : index
    %c0_5 = arith.constant 0 : index
    %c0_6 = arith.constant 0 : index
    %18 = vector.load %arg1[%c0_4, %c0_5, %c0_6] : memref<1x18x512xf32, #tpu.memory_space<vmem>>, vector<1x18x512xf32>
    %19 = vector.shape_cast %18 : vector<1x18x512xf32> to vector<18x512xf32>
    %cst = arith.constant dense<0.000000e+00> : vector<32x512xf32>
    %20 = tpu.matmul %17, %19, %cst {dimension_numbers = #tpu.dot_dimension_numbers<[1], [0], [0], [1], [0, 0, 1, 1], [], []>} : vector<32x18xf32>, vector<18x512xf32>, vector<32x512xf32> -> vector<32x512xf32>
    %c0_7 = arith.constant 0 : index
    %c0_8 = arith.constant 0 : index
    %21 = vector.load %arg4[%c0_7, %c0_8] : memref<32x1xf32, #tpu.memory_space<vmem>>, vector<32x1xf32>
    %22 = vector.broadcast %21 : vector<32x1xf32> to vector<32x512xf32>
    %23 = arith.addf %20, %22 : vector<32x512xf32>
    %cst_9 = arith.constant 0.000000e+00 : f32
    %24 = vector.broadcast %cst_9 : f32 to vector<8x128xf32>
    %25 = vector.extract_strided_slice %23 {offsets = [0, 0], sizes = [32, 128], strides = [1, 1]} : vector<32x512xf32> to vector<32x128xf32>
    %26 = vector.extract_strided_slice %25 {offsets = [0, 0], sizes = [24, 128], strides = [1, 1]} : vector<32x128xf32> to vector<24x128xf32>
    %cst_10 = arith.constant 5.000000e-01 : f32
    %27 = vector.broadcast %cst_10 : f32 to vector<24x128xf32>
    %28 = arith.mulf %27, %26 : vector<24x128xf32>
    %29 = math.tanh %28 : vector<24x128xf32>
    %30 = vector.extract_strided_slice %29 {offsets = [0, 0], sizes = [8, 128], strides = [1, 1]} : vector<24x128xf32> to vector<8x128xf32>
    %cst_11 = arith.constant 5.000000e-01 : f32
    %31 = vector.broadcast %cst_11 : f32 to vector<8x128xf32>
    %32 = arith.mulf %31, %30 : vector<8x128xf32>
    %cst_12 = arith.constant 5.000000e-01 : f32
    %33 = vector.broadcast %cst_12 : f32 to vector<8x128xf32>
    %34 = arith.addf %32, %33 : vector<8x128xf32>
    %35 = vector.extract_strided_slice %29 {offsets = [8, 0], sizes = [8, 128], strides = [1, 1]} : vector<24x128xf32> to vector<8x128xf32>
    %cst_13 = arith.constant 5.000000e-01 : f32
    %36 = vector.broadcast %cst_13 : f32 to vector<8x128xf32>
    %37 = arith.mulf %36, %35 : vector<8x128xf32>
    %cst_14 = arith.constant 5.000000e-01 : f32
    %38 = vector.broadcast %cst_14 : f32 to vector<8x128xf32>
    %39 = arith.addf %37, %38 : vector<8x128xf32>
    %40 = vector.extract_strided_slice %29 {offsets = [16, 0], sizes = [8, 128], strides = [1, 1]} : vector<24x128xf32> to vector<8x128xf32>
    %cst_15 = arith.constant 5.000000e-01 : f32
    %41 = vector.broadcast %cst_15 : f32 to vector<8x128xf32>
    %42 = arith.mulf %41, %40 : vector<8x128xf32>
    %cst_16 = arith.constant 5.000000e-01 : f32
    %43 = vector.broadcast %cst_16 : f32 to vector<8x128xf32>
    %44 = arith.addf %42, %43 : vector<8x128xf32>
    %45 = vector.extract_strided_slice %25 {offsets = [24, 0], sizes = [8, 128], strides = [1, 1]} : vector<32x128xf32> to vector<8x128xf32>
    %46 = math.tanh %45 : vector<8x128xf32>
    %47 = arith.mulf %39, %24 : vector<8x128xf32>
    %48 = arith.mulf %34, %46 : vector<8x128xf32>
    %49 = arith.addf %47, %48 : vector<8x128xf32>
    %50 = math.tanh %49 : vector<8x128xf32>
    %51 = arith.mulf %44, %50 : vector<8x128xf32>
    %c0_17 = arith.constant 0 : index
    %c0_18 = arith.constant 0 : index
    %c0_19 = arith.constant 0 : index
    %c0_20 = arith.constant 0 : index
    %52 = vector.load %arg5[%c0_17, %c0_18, %c0_19, %c0_20] : memref<1x4x8x128xf32, #tpu.memory_space<vmem>>, vector<1x1x8x128xf32>
    %53 = vector.shape_cast %52 : vector<1x1x8x128xf32> to vector<8x128xf32>
    %54 = vector.shape_cast %51 : vector<8x128xf32> to vector<1x1x8x128xf32>
    tpu.vector_store %arg5[%c0_17, %c0_18, %c0_19, %c0_20], %54 {strides = array<i32>} : memref<1x4x8x128xf32, #tpu.memory_space<vmem>>, vector<1x1x8x128xf32>,
    %55 = vector.extract_strided_slice %23 {offsets = [0, 128], sizes = [32, 128], strides = [1, 1]} : vector<32x512xf32> to vector<32x128xf32>
    %cst_21 = arith.constant 0.000000e+00 : f32
    %56 = vector.broadcast %cst_21 : f32 to vector<8x17xf32>
    %57 = vector.extract_strided_slice %51 {offsets = [0, 0], sizes = [8, 111], strides = [1, 1]} : vector<8x128xf32> to vector<8x111xf32>
    %58 = tpu.concatenate %56, %57 in 1 : vector<8x17xf32>, vector<8x111xf32> -> vector<8x128xf32>
    %c1_i32_22 = arith.constant 1 : i32
    %59 = vector.broadcast %c1_i32_22 : i32 to vector<8x128xi32>
    %60 = arith.cmpi sge, %16, %59 : vector<8x128xi32>
    %cst_23 = arith.constant 0.000000e+00 : f32
    %61 = vector.broadcast %cst_23 : f32 to vector<8x128xf32>
    %62 = arith.select %60, %58, %61 : vector<8x128xi1>, vector<8x128xf32>
    %cst_24 = arith.constant 0.000000e+00 : f32
    %63 = vector.broadcast %cst_24 : f32 to vector<8x16xf32>
    %64 = vector.extract_strided_slice %51 {offsets = [0, 0], sizes = [8, 112], strides = [1, 1]} : vector<8x128xf32> to vector<8x112xf32>
    %65 = tpu.concatenate %63, %64 in 1 : vector<8x16xf32>, vector<8x112xf32> -> vector<8x128xf32>
    %cst_25 = arith.constant 0.000000e+00 : f32
    %66 = vector.broadcast %cst_25 : f32 to vector<8x15xf32>
    %67 = vector.extract_strided_slice %51 {offsets = [0, 0], sizes = [8, 113], strides = [1, 1]} : vector<8x128xf32> to vector<8x113xf32>
    %68 = tpu.concatenate %66, %67 in 1 : vector<8x15xf32>, vector<8x113xf32> -> vector<8x128xf32>
    %c15_i32 = arith.constant 15 : i32
    %69 = vector.broadcast %c15_i32 : i32 to vector<8x128xi32>
    %70 = arith.cmpi slt, %16, %69 : vector<8x128xi32>
    %cst_26 = arith.constant 0.000000e+00 : f32
    %71 = vector.broadcast %cst_26 : f32 to vector<8x128xf32>
    %72 = arith.select %70, %68, %71 : vector<8x128xi1>, vector<8x128xf32>
    %cst_27 = arith.constant 0.000000e+00 : f32
    %73 = vector.broadcast %cst_27 : f32 to vector<8x1xf32>
    %74 = vector.extract_strided_slice %51 {offsets = [0, 0], sizes = [8, 127], strides = [1, 1]} : vector<8x128xf32> to vector<8x127xf32>
    %75 = tpu.concatenate %73, %74 in 1 : vector<8x1xf32>, vector<8x127xf32> -> vector<8x128xf32>
    %c1_i32_28 = arith.constant 1 : i32
    %76 = vector.broadcast %c1_i32_28 : i32 to vector<8x128xi32>
    %77 = arith.cmpi sge, %16, %76 : vector<8x128xi32>
    %cst_29 = arith.constant 0.000000e+00 : f32
    %78 = vector.broadcast %cst_29 : f32 to vector<8x128xf32>
    %79 = arith.select %77, %75, %78 : vector<8x128xi1>, vector<8x128xf32>
    %cst_30 = arith.constant 0.000000e+00 : f32
    %80 = vector.broadcast %cst_30 : f32 to vector<8x1xf32>
    %81 = vector.extract_strided_slice %51 {offsets = [0, 1], sizes = [8, 127], strides = [1, 1]} : vector<8x128xf32> to vector<8x127xf32>
    %82 = tpu.concatenate %81, %80 in 1 : vector<8x127xf32>, vector<8x1xf32> -> vector<8x128xf32>
    %c15_i32_31 = arith.constant 15 : i32
    %83 = vector.broadcast %c15_i32_31 : i32 to vector<8x128xi32>
    %84 = arith.cmpi slt, %16, %83 : vector<8x128xi32>
    %cst_32 = arith.constant 0.000000e+00 : f32
    %85 = vector.broadcast %cst_32 : f32 to vector<8x128xf32>
    %86 = arith.select %84, %82, %85 : vector<8x128xi1>, vector<8x128xf32>
    %cst_33 = arith.constant 0.000000e+00 : f32
    %87 = vector.broadcast %cst_33 : f32 to vector<8x15xf32>
    %88 = vector.extract_strided_slice %51 {offsets = [0, 15], sizes = [8, 113], strides = [1, 1]} : vector<8x128xf32> to vector<8x113xf32>
    %89 = tpu.concatenate %88, %87 in 1 : vector<8x113xf32>, vector<8x15xf32> -> vector<8x128xf32>
    %c1_i32_34 = arith.constant 1 : i32
    %90 = vector.broadcast %c1_i32_34 : i32 to vector<8x128xi32>
    %91 = arith.cmpi sge, %16, %90 : vector<8x128xi32>
    %cst_35 = arith.constant 0.000000e+00 : f32
    %92 = vector.broadcast %cst_35 : f32 to vector<8x128xf32>
    %93 = arith.select %91, %89, %92 : vector<8x128xi1>, vector<8x128xf32>
    %cst_36 = arith.constant 0.000000e+00 : f32
    %94 = vector.broadcast %cst_36 : f32 to vector<8x16xf32>
    %95 = vector.extract_strided_slice %51 {offsets = [0, 16], sizes = [8, 112], strides = [1, 1]} : vector<8x128xf32> to vector<8x112xf32>
    %96 = tpu.concatenate %95, %94 in 1 : vector<8x112xf32>, vector<8x16xf32> -> vector<8x128xf32>
    %cst_37 = arith.constant 0.000000e+00 : f32
    %97 = vector.broadcast %cst_37 : f32 to vector<8x17xf32>
    %98 = vector.extract_strided_slice %51 {offsets = [0, 17], sizes = [8, 111], strides = [1, 1]} : vector<8x128xf32> to vector<8x111xf32>
    %99 = tpu.concatenate %98, %97 in 1 : vector<8x111xf32>, vector<8x17xf32> -> vector<8x128xf32>
    %c15_i32_38 = arith.constant 15 : i32
    %100 = vector.broadcast %c15_i32_38 : i32 to vector<8x128xi32>
    %101 = arith.cmpi slt, %16, %100 : vector<8x128xi32>
    %cst_39 = arith.constant 0.000000e+00 : f32
    %102 = vector.broadcast %cst_39 : f32 to vector<8x128xf32>
    %103 = arith.select %101, %99, %102 : vector<8x128xi1>, vector<8x128xf32>
    %104 = tpu.concatenate %62, %65, %72, %79, %51, %86, %93, %96, %103 in 0 : vector<8x128xf32>, vector<8x128xf32>, vector<8x128xf32>, vector<8x128xf32>, vector<8x128xf32>, vector<8x128xf32>, vector<8x128xf32>, vector<8x128xf32>, vector<8x128xf32> -> vector<72x128xf32>
    %c0_40 = arith.constant 0 : index
    %c0_41 = arith.constant 0 : index
    %105 = vector.load %arg3[%c0_40, %c0_41] : memref<32x72xf32, #tpu.memory_space<vmem>>, vector<32x72xf32>
    %cst_42 = arith.constant dense<0.000000e+00> : vector<32x128xf32>
    %106 = tpu.matmul %105, %104, %cst_42 {dimension_numbers = #tpu.dot_dimension_numbers<[1], [0], [0], [1], [0, 0, 1, 1], [], []>} : vector<32x72xf32>, vector<72x128xf32>, vector<32x128xf32> -> vector<32x128xf32>
    %107 = arith.addf %55, %106 : vector<32x128xf32>
    %108 = vector.extract_strided_slice %107 {offsets = [0, 0], sizes = [24, 128], strides = [1, 1]} : vector<32x128xf32> to vector<24x128xf32>
    %cst_43 = arith.constant 5.000000e-01 : f32
    %109 = vector.broadcast %cst_43 : f32 to vector<24x128xf32>
    %110 = arith.mulf %109, %108 : vector<24x128xf32>
    %111 = math.tanh %110 : vector<24x128xf32>
    %112 = vector.extract_strided_slice %111 {offsets = [0, 0], sizes = [8, 128], strides = [1, 1]} : vector<24x128xf32> to vector<8x128xf32>
    %cst_44 = arith.constant 5.000000e-01 : f32
    %113 = vector.broadcast %cst_44 : f32 to vector<8x128xf32>
    %114 = arith.mulf %113, %112 : vector<8x128xf32>
    %cst_45 = arith.constant 5.000000e-01 : f32
    %115 = vector.broadcast %cst_45 : f32 to vector<8x128xf32>
    %116 = arith.addf %114, %115 : vector<8x128xf32>
    %117 = vector.extract_strided_slice %111 {offsets = [8, 0], sizes = [8, 128], strides = [1, 1]} : vector<24x128xf32> to vector<8x128xf32>
    %cst_46 = arith.constant 5.000000e-01 : f32
    %118 = vector.broadcast %cst_46 : f32 to vector<8x128xf32>
    %119 = arith.mulf %118, %117 : vector<8x128xf32>
    %cst_47 = arith.constant 5.000000e-01 : f32
    %120 = vector.broadcast %cst_47 : f32 to vector<8x128xf32>
    %121 = arith.addf %119, %120 : vector<8x128xf32>
    %122 = vector.extract_strided_slice %111 {offsets = [16, 0], sizes = [8, 128], strides = [1, 1]} : vector<24x128xf32> to vector<8x128xf32>
    %cst_48 = arith.constant 5.000000e-01 : f32
    %123 = vector.broadcast %cst_48 : f32 to vector<8x128xf32>
    %124 = arith.mulf %123, %122 : vector<8x128xf32>
    %cst_49 = arith.constant 5.000000e-01 : f32
    %125 = vector.broadcast %cst_49 : f32 to vector<8x128xf32>
    %126 = arith.addf %124, %125 : vector<8x128xf32>
    %127 = vector.extract_strided_slice %107 {offsets = [24, 0], sizes = [8, 128], strides = [1, 1]} : vector<32x128xf32> to vector<8x128xf32>
    %128 = math.tanh %127 : vector<8x128xf32>
    %129 = arith.mulf %121, %49 : vector<8x128xf32>
    %130 = arith.mulf %116, %128 : vector<8x128xf32>
    %131 = arith.addf %129, %130 : vector<8x128xf32>
    %132 = math.tanh %131 : vector<8x128xf32>
    %133 = arith.mulf %126, %132 : vector<8x128xf32>
    %c0_50 = arith.constant 0 : index
    %c1 = arith.constant 1 : index
    %c0_51 = arith.constant 0 : index
    %c0_52 = arith.constant 0 : index
    %134 = vector.load %arg5[%c0_50, %c1, %c0_51, %c0_52] : memref<1x4x8x128xf32, #tpu.memory_space<vmem>>, vector<1x1x8x128xf32>
    %135 = vector.shape_cast %134 : vector<1x1x8x128xf32> to vector<8x128xf32>
    %136 = vector.shape_cast %133 : vector<8x128xf32> to vector<1x1x8x128xf32>
    tpu.vector_store %arg5[%c0_50, %c1, %c0_51, %c0_52], %136 {strides = array<i32>} : memref<1x4x8x128xf32, #tpu.memory_space<vmem>>, vector<1x1x8x128xf32>,
    %137 = vector.extract_strided_slice %23 {offsets = [0, 256], sizes = [32, 128], strides = [1, 1]} : vector<32x512xf32> to vector<32x128xf32>
    %cst_53 = arith.constant 0.000000e+00 : f32
    %138 = vector.broadcast %cst_53 : f32 to vector<8x17xf32>
    %139 = vector.extract_strided_slice %133 {offsets = [0, 0], sizes = [8, 111], strides = [1, 1]} : vector<8x128xf32> to vector<8x111xf32>
    %140 = tpu.concatenate %138, %139 in 1 : vector<8x17xf32>, vector<8x111xf32> -> vector<8x128xf32>
    %c1_i32_54 = arith.constant 1 : i32
    %141 = vector.broadcast %c1_i32_54 : i32 to vector<8x128xi32>
    %142 = arith.cmpi sge, %16, %141 : vector<8x128xi32>
    %cst_55 = arith.constant 0.000000e+00 : f32
    %143 = vector.broadcast %cst_55 : f32 to vector<8x128xf32>
    %144 = arith.select %142, %140, %143 : vector<8x128xi1>, vector<8x128xf32>
    %cst_56 = arith.constant 0.000000e+00 : f32
    %145 = vector.broadcast %cst_56 : f32 to vector<8x16xf32>
    %146 = vector.extract_strided_slice %133 {offsets = [0, 0], sizes = [8, 112], strides = [1, 1]} : vector<8x128xf32> to vector<8x112xf32>
    %147 = tpu.concatenate %145, %146 in 1 : vector<8x16xf32>, vector<8x112xf32> -> vector<8x128xf32>
    %cst_57 = arith.constant 0.000000e+00 : f32
    %148 = vector.broadcast %cst_57 : f32 to vector<8x15xf32>
    %149 = vector.extract_strided_slice %133 {offsets = [0, 0], sizes = [8, 113], strides = [1, 1]} : vector<8x128xf32> to vector<8x113xf32>
    %150 = tpu.concatenate %148, %149 in 1 : vector<8x15xf32>, vector<8x113xf32> -> vector<8x128xf32>
    %c15_i32_58 = arith.constant 15 : i32
    %151 = vector.broadcast %c15_i32_58 : i32 to vector<8x128xi32>
    %152 = arith.cmpi slt, %16, %151 : vector<8x128xi32>
    %cst_59 = arith.constant 0.000000e+00 : f32
    %153 = vector.broadcast %cst_59 : f32 to vector<8x128xf32>
    %154 = arith.select %152, %150, %153 : vector<8x128xi1>, vector<8x128xf32>
    %cst_60 = arith.constant 0.000000e+00 : f32
    %155 = vector.broadcast %cst_60 : f32 to vector<8x1xf32>
    %156 = vector.extract_strided_slice %133 {offsets = [0, 0], sizes = [8, 127], strides = [1, 1]} : vector<8x128xf32> to vector<8x127xf32>
    %157 = tpu.concatenate %155, %156 in 1 : vector<8x1xf32>, vector<8x127xf32> -> vector<8x128xf32>
    %c1_i32_61 = arith.constant 1 : i32
    %158 = vector.broadcast %c1_i32_61 : i32 to vector<8x128xi32>
    %159 = arith.cmpi sge, %16, %158 : vector<8x128xi32>
    %cst_62 = arith.constant 0.000000e+00 : f32
    %160 = vector.broadcast %cst_62 : f32 to vector<8x128xf32>
    %161 = arith.select %159, %157, %160 : vector<8x128xi1>, vector<8x128xf32>
    %cst_63 = arith.constant 0.000000e+00 : f32
    %162 = vector.broadcast %cst_63 : f32 to vector<8x1xf32>
    %163 = vector.extract_strided_slice %133 {offsets = [0, 1], sizes = [8, 127], strides = [1, 1]} : vector<8x128xf32> to vector<8x127xf32>
    %164 = tpu.concatenate %163, %162 in 1 : vector<8x127xf32>, vector<8x1xf32> -> vector<8x128xf32>
    %c15_i32_64 = arith.constant 15 : i32
    %165 = vector.broadcast %c15_i32_64 : i32 to vector<8x128xi32>
    %166 = arith.cmpi slt, %16, %165 : vector<8x128xi32>
    %cst_65 = arith.constant 0.000000e+00 : f32
    %167 = vector.broadcast %cst_65 : f32 to vector<8x128xf32>
    %168 = arith.select %166, %164, %167 : vector<8x128xi1>, vector<8x128xf32>
    %cst_66 = arith.constant 0.000000e+00 : f32
    %169 = vector.broadcast %cst_66 : f32 to vector<8x15xf32>
    %170 = vector.extract_strided_slice %133 {offsets = [0, 15], sizes = [8, 113], strides = [1, 1]} : vector<8x128xf32> to vector<8x113xf32>
    %171 = tpu.concatenate %170, %169 in 1 : vector<8x113xf32>, vector<8x15xf32> -> vector<8x128xf32>
    %c1_i32_67 = arith.constant 1 : i32
    %172 = vector.broadcast %c1_i32_67 : i32 to vector<8x128xi32>
    %173 = arith.cmpi sge, %16, %172 : vector<8x128xi32>
    %cst_68 = arith.constant 0.000000e+00 : f32
    %174 = vector.broadcast %cst_68 : f32 to vector<8x128xf32>
    %175 = arith.select %173, %171, %174 : vector<8x128xi1>, vector<8x128xf32>
    %cst_69 = arith.constant 0.000000e+00 : f32
    %176 = vector.broadcast %cst_69 : f32 to vector<8x16xf32>
    %177 = vector.extract_strided_slice %133 {offsets = [0, 16], sizes = [8, 112], strides = [1, 1]} : vector<8x128xf32> to vector<8x112xf32>
    %178 = tpu.concatenate %177, %176 in 1 : vector<8x112xf32>, vector<8x16xf32> -> vector<8x128xf32>
    %cst_70 = arith.constant 0.000000e+00 : f32
    %179 = vector.broadcast %cst_70 : f32 to vector<8x17xf32>
    %180 = vector.extract_strided_slice %133 {offsets = [0, 17], sizes = [8, 111], strides = [1, 1]} : vector<8x128xf32> to vector<8x111xf32>
    %181 = tpu.concatenate %180, %179 in 1 : vector<8x111xf32>, vector<8x17xf32> -> vector<8x128xf32>
    %c15_i32_71 = arith.constant 15 : i32
    %182 = vector.broadcast %c15_i32_71 : i32 to vector<8x128xi32>
    %183 = arith.cmpi slt, %16, %182 : vector<8x128xi32>
    %cst_72 = arith.constant 0.000000e+00 : f32
    %184 = vector.broadcast %cst_72 : f32 to vector<8x128xf32>
    %185 = arith.select %183, %181, %184 : vector<8x128xi1>, vector<8x128xf32>
    %186 = tpu.concatenate %144, %147, %154, %161, %133, %168, %175, %178, %185 in 0 : vector<8x128xf32>, vector<8x128xf32>, vector<8x128xf32>, vector<8x128xf32>, vector<8x128xf32>, vector<8x128xf32>, vector<8x128xf32>, vector<8x128xf32>, vector<8x128xf32> -> vector<72x128xf32>
    %c0_73 = arith.constant 0 : index
    %c0_74 = arith.constant 0 : index
    %187 = vector.load %arg3[%c0_73, %c0_74] : memref<32x72xf32, #tpu.memory_space<vmem>>, vector<32x72xf32>
    %cst_75 = arith.constant dense<0.000000e+00> : vector<32x128xf32>
    %188 = tpu.matmul %187, %186, %cst_75 {dimension_numbers = #tpu.dot_dimension_numbers<[1], [0], [0], [1], [0, 0, 1, 1], [], []>} : vector<32x72xf32>, vector<72x128xf32>, vector<32x128xf32> -> vector<32x128xf32>
    %189 = arith.addf %137, %188 : vector<32x128xf32>
    %190 = vector.extract_strided_slice %189 {offsets = [0, 0], sizes = [24, 128], strides = [1, 1]} : vector<32x128xf32> to vector<24x128xf32>
    %cst_76 = arith.constant 5.000000e-01 : f32
    %191 = vector.broadcast %cst_76 : f32 to vector<24x128xf32>
    %192 = arith.mulf %191, %190 : vector<24x128xf32>
    %193 = math.tanh %192 : vector<24x128xf32>
    %194 = vector.extract_strided_slice %193 {offsets = [0, 0], sizes = [8, 128], strides = [1, 1]} : vector<24x128xf32> to vector<8x128xf32>
    %cst_77 = arith.constant 5.000000e-01 : f32
    %195 = vector.broadcast %cst_77 : f32 to vector<8x128xf32>
    %196 = arith.mulf %195, %194 : vector<8x128xf32>
    %cst_78 = arith.constant 5.000000e-01 : f32
    %197 = vector.broadcast %cst_78 : f32 to vector<8x128xf32>
    %198 = arith.addf %196, %197 : vector<8x128xf32>
    %199 = vector.extract_strided_slice %193 {offsets = [8, 0], sizes = [8, 128], strides = [1, 1]} : vector<24x128xf32> to vector<8x128xf32>
    %cst_79 = arith.constant 5.000000e-01 : f32
    %200 = vector.broadcast %cst_79 : f32 to vector<8x128xf32>
    %201 = arith.mulf %200, %199 : vector<8x128xf32>
    %cst_80 = arith.constant 5.000000e-01 : f32
    %202 = vector.broadcast %cst_80 : f32 to vector<8x128xf32>
    %203 = arith.addf %201, %202 : vector<8x128xf32>
    %204 = vector.extract_strided_slice %193 {offsets = [16, 0], sizes = [8, 128], strides = [1, 1]} : vector<24x128xf32> to vector<8x128xf32>
    %cst_81 = arith.constant 5.000000e-01 : f32
    %205 = vector.broadcast %cst_81 : f32 to vector<8x128xf32>
    %206 = arith.mulf %205, %204 : vector<8x128xf32>
    %cst_82 = arith.constant 5.000000e-01 : f32
    %207 = vector.broadcast %cst_82 : f32 to vector<8x128xf32>
    %208 = arith.addf %206, %207 : vector<8x128xf32>
    %209 = vector.extract_strided_slice %189 {offsets = [24, 0], sizes = [8, 128], strides = [1, 1]} : vector<32x128xf32> to vector<8x128xf32>
    %210 = math.tanh %209 : vector<8x128xf32>
    %211 = arith.mulf %203, %131 : vector<8x128xf32>
    %212 = arith.mulf %198, %210 : vector<8x128xf32>
    %213 = arith.addf %211, %212 : vector<8x128xf32>
    %214 = math.tanh %213 : vector<8x128xf32>
    %215 = arith.mulf %208, %214 : vector<8x128xf32>
    %c0_83 = arith.constant 0 : index
    %c2 = arith.constant 2 : index
    %c0_84 = arith.constant 0 : index
    %c0_85 = arith.constant 0 : index
    %216 = vector.load %arg5[%c0_83, %c2, %c0_84, %c0_85] : memref<1x4x8x128xf32, #tpu.memory_space<vmem>>, vector<1x1x8x128xf32>
    %217 = vector.shape_cast %216 : vector<1x1x8x128xf32> to vector<8x128xf32>
    %218 = vector.shape_cast %215 : vector<8x128xf32> to vector<1x1x8x128xf32>
    tpu.vector_store %arg5[%c0_83, %c2, %c0_84, %c0_85], %218 {strides = array<i32>} : memref<1x4x8x128xf32, #tpu.memory_space<vmem>>, vector<1x1x8x128xf32>,
    %219 = vector.extract_strided_slice %23 {offsets = [0, 384], sizes = [32, 128], strides = [1, 1]} : vector<32x512xf32> to vector<32x128xf32>
    %cst_86 = arith.constant 0.000000e+00 : f32
    %220 = vector.broadcast %cst_86 : f32 to vector<8x17xf32>
    %221 = vector.extract_strided_slice %215 {offsets = [0, 0], sizes = [8, 111], strides = [1, 1]} : vector<8x128xf32> to vector<8x111xf32>
    %222 = tpu.concatenate %220, %221 in 1 : vector<8x17xf32>, vector<8x111xf32> -> vector<8x128xf32>
    %c1_i32_87 = arith.constant 1 : i32
    %223 = vector.broadcast %c1_i32_87 : i32 to vector<8x128xi32>
    %224 = arith.cmpi sge, %16, %223 : vector<8x128xi32>
    %cst_88 = arith.constant 0.000000e+00 : f32
    %225 = vector.broadcast %cst_88 : f32 to vector<8x128xf32>
    %226 = arith.select %224, %222, %225 : vector<8x128xi1>, vector<8x128xf32>
    %cst_89 = arith.constant 0.000000e+00 : f32
    %227 = vector.broadcast %cst_89 : f32 to vector<8x16xf32>
    %228 = vector.extract_strided_slice %215 {offsets = [0, 0], sizes = [8, 112], strides = [1, 1]} : vector<8x128xf32> to vector<8x112xf32>
    %229 = tpu.concatenate %227, %228 in 1 : vector<8x16xf32>, vector<8x112xf32> -> vector<8x128xf32>
    %cst_90 = arith.constant 0.000000e+00 : f32
    %230 = vector.broadcast %cst_90 : f32 to vector<8x15xf32>
    %231 = vector.extract_strided_slice %215 {offsets = [0, 0], sizes = [8, 113], strides = [1, 1]} : vector<8x128xf32> to vector<8x113xf32>
    %232 = tpu.concatenate %230, %231 in 1 : vector<8x15xf32>, vector<8x113xf32> -> vector<8x128xf32>
    %c15_i32_91 = arith.constant 15 : i32
    %233 = vector.broadcast %c15_i32_91 : i32 to vector<8x128xi32>
    %234 = arith.cmpi slt, %16, %233 : vector<8x128xi32>
    %cst_92 = arith.constant 0.000000e+00 : f32
    %235 = vector.broadcast %cst_92 : f32 to vector<8x128xf32>
    %236 = arith.select %234, %232, %235 : vector<8x128xi1>, vector<8x128xf32>
    %cst_93 = arith.constant 0.000000e+00 : f32
    %237 = vector.broadcast %cst_93 : f32 to vector<8x1xf32>
    %238 = vector.extract_strided_slice %215 {offsets = [0, 0], sizes = [8, 127], strides = [1, 1]} : vector<8x128xf32> to vector<8x127xf32>
    %239 = tpu.concatenate %237, %238 in 1 : vector<8x1xf32>, vector<8x127xf32> -> vector<8x128xf32>
    %c1_i32_94 = arith.constant 1 : i32
    %240 = vector.broadcast %c1_i32_94 : i32 to vector<8x128xi32>
    %241 = arith.cmpi sge, %16, %240 : vector<8x128xi32>
    %cst_95 = arith.constant 0.000000e+00 : f32
    %242 = vector.broadcast %cst_95 : f32 to vector<8x128xf32>
    %243 = arith.select %241, %239, %242 : vector<8x128xi1>, vector<8x128xf32>
    %cst_96 = arith.constant 0.000000e+00 : f32
    %244 = vector.broadcast %cst_96 : f32 to vector<8x1xf32>
    %245 = vector.extract_strided_slice %215 {offsets = [0, 1], sizes = [8, 127], strides = [1, 1]} : vector<8x128xf32> to vector<8x127xf32>
    %246 = tpu.concatenate %245, %244 in 1 : vector<8x127xf32>, vector<8x1xf32> -> vector<8x128xf32>
    %c15_i32_97 = arith.constant 15 : i32
    %247 = vector.broadcast %c15_i32_97 : i32 to vector<8x128xi32>
    %248 = arith.cmpi slt, %16, %247 : vector<8x128xi32>
    %cst_98 = arith.constant 0.000000e+00 : f32
    %249 = vector.broadcast %cst_98 : f32 to vector<8x128xf32>
    %250 = arith.select %248, %246, %249 : vector<8x128xi1>, vector<8x128xf32>
    %cst_99 = arith.constant 0.000000e+00 : f32
    %251 = vector.broadcast %cst_99 : f32 to vector<8x15xf32>
    %252 = vector.extract_strided_slice %215 {offsets = [0, 15], sizes = [8, 113], strides = [1, 1]} : vector<8x128xf32> to vector<8x113xf32>
    %253 = tpu.concatenate %252, %251 in 1 : vector<8x113xf32>, vector<8x15xf32> -> vector<8x128xf32>
    %c1_i32_100 = arith.constant 1 : i32
    %254 = vector.broadcast %c1_i32_100 : i32 to vector<8x128xi32>
    %255 = arith.cmpi sge, %16, %254 : vector<8x128xi32>
    %cst_101 = arith.constant 0.000000e+00 : f32
    %256 = vector.broadcast %cst_101 : f32 to vector<8x128xf32>
    %257 = arith.select %255, %253, %256 : vector<8x128xi1>, vector<8x128xf32>
    %cst_102 = arith.constant 0.000000e+00 : f32
    %258 = vector.broadcast %cst_102 : f32 to vector<8x16xf32>
    %259 = vector.extract_strided_slice %215 {offsets = [0, 16], sizes = [8, 112], strides = [1, 1]} : vector<8x128xf32> to vector<8x112xf32>
    %260 = tpu.concatenate %259, %258 in 1 : vector<8x112xf32>, vector<8x16xf32> -> vector<8x128xf32>
    %cst_103 = arith.constant 0.000000e+00 : f32
    %261 = vector.broadcast %cst_103 : f32 to vector<8x17xf32>
    %262 = vector.extract_strided_slice %215 {offsets = [0, 17], sizes = [8, 111], strides = [1, 1]} : vector<8x128xf32> to vector<8x111xf32>
    %263 = tpu.concatenate %262, %261 in 1 : vector<8x111xf32>, vector<8x17xf32> -> vector<8x128xf32>
    %c15_i32_104 = arith.constant 15 : i32
    %264 = vector.broadcast %c15_i32_104 : i32 to vector<8x128xi32>
    %265 = arith.cmpi slt, %16, %264 : vector<8x128xi32>
    %cst_105 = arith.constant 0.000000e+00 : f32
    %266 = vector.broadcast %cst_105 : f32 to vector<8x128xf32>
    %267 = arith.select %265, %263, %266 : vector<8x128xi1>, vector<8x128xf32>
    %268 = tpu.concatenate %226, %229, %236, %243, %215, %250, %257, %260, %267 in 0 : vector<8x128xf32>, vector<8x128xf32>, vector<8x128xf32>, vector<8x128xf32>, vector<8x128xf32>, vector<8x128xf32>, vector<8x128xf32>, vector<8x128xf32>, vector<8x128xf32> -> vector<72x128xf32>
    %c0_106 = arith.constant 0 : index
    %c0_107 = arith.constant 0 : index
    %269 = vector.load %arg3[%c0_106, %c0_107] : memref<32x72xf32, #tpu.memory_space<vmem>>, vector<32x72xf32>
    %cst_108 = arith.constant dense<0.000000e+00> : vector<32x128xf32>
    %270 = tpu.matmul %269, %268, %cst_108 {dimension_numbers = #tpu.dot_dimension_numbers<[1], [0], [0], [1], [0, 0, 1, 1], [], []>} : vector<32x72xf32>, vector<72x128xf32>, vector<32x128xf32> -> vector<32x128xf32>
    %271 = arith.addf %219, %270 : vector<32x128xf32>
    %272 = vector.extract_strided_slice %271 {offsets = [0, 0], sizes = [24, 128], strides = [1, 1]} : vector<32x128xf32> to vector<24x128xf32>
    %cst_109 = arith.constant 5.000000e-01 : f32
    %273 = vector.broadcast %cst_109 : f32 to vector<24x128xf32>
    %274 = arith.mulf %273, %272 : vector<24x128xf32>
    %275 = math.tanh %274 : vector<24x128xf32>
    %276 = vector.extract_strided_slice %275 {offsets = [0, 0], sizes = [8, 128], strides = [1, 1]} : vector<24x128xf32> to vector<8x128xf32>
    %cst_110 = arith.constant 5.000000e-01 : f32
    %277 = vector.broadcast %cst_110 : f32 to vector<8x128xf32>
    %278 = arith.mulf %277, %276 : vector<8x128xf32>
    %cst_111 = arith.constant 5.000000e-01 : f32
    %279 = vector.broadcast %cst_111 : f32 to vector<8x128xf32>
    %280 = arith.addf %278, %279 : vector<8x128xf32>
    %281 = vector.extract_strided_slice %275 {offsets = [8, 0], sizes = [8, 128], strides = [1, 1]} : vector<24x128xf32> to vector<8x128xf32>
    %cst_112 = arith.constant 5.000000e-01 : f32
    %282 = vector.broadcast %cst_112 : f32 to vector<8x128xf32>
    %283 = arith.mulf %282, %281 : vector<8x128xf32>
    %cst_113 = arith.constant 5.000000e-01 : f32
    %284 = vector.broadcast %cst_113 : f32 to vector<8x128xf32>
    %285 = arith.addf %283, %284 : vector<8x128xf32>
    %286 = vector.extract_strided_slice %275 {offsets = [16, 0], sizes = [8, 128], strides = [1, 1]} : vector<24x128xf32> to vector<8x128xf32>
    %cst_114 = arith.constant 5.000000e-01 : f32
    %287 = vector.broadcast %cst_114 : f32 to vector<8x128xf32>
    %288 = arith.mulf %287, %286 : vector<8x128xf32>
    %cst_115 = arith.constant 5.000000e-01 : f32
    %289 = vector.broadcast %cst_115 : f32 to vector<8x128xf32>
    %290 = arith.addf %288, %289 : vector<8x128xf32>
    %291 = vector.extract_strided_slice %271 {offsets = [24, 0], sizes = [8, 128], strides = [1, 1]} : vector<32x128xf32> to vector<8x128xf32>
    %292 = math.tanh %291 : vector<8x128xf32>
    %293 = arith.mulf %285, %213 : vector<8x128xf32>
    %294 = arith.mulf %280, %292 : vector<8x128xf32>
    %295 = arith.addf %293, %294 : vector<8x128xf32>
    %296 = math.tanh %295 : vector<8x128xf32>
    %297 = arith.mulf %290, %296 : vector<8x128xf32>
    %c0_116 = arith.constant 0 : index
    %c3 = arith.constant 3 : index
    %c0_117 = arith.constant 0 : index
    %c0_118 = arith.constant 0 : index
    %298 = vector.load %arg5[%c0_116, %c3, %c0_117, %c0_118] : memref<1x4x8x128xf32, #tpu.memory_space<vmem>>, vector<1x1x8x128xf32>
    %299 = vector.shape_cast %298 : vector<1x1x8x128xf32> to vector<8x128xf32>
    %300 = vector.shape_cast %297 : vector<8x128xf32> to vector<1x1x8x128xf32>
    tpu.vector_store %arg5[%c0_116, %c3, %c0_117, %c0_118], %300 {strides = array<i32>} : memref<1x4x8x128xf32, #tpu.memory_space<vmem>>, vector<1x1x8x128xf32>,
    return
  }
  func.func @transform_0(%arg0: i32) -> (i32, i32, i32) {
    %c0_i32 = arith.constant 0 : i32
    %c0_i32_0 = arith.constant 0 : i32
    %c0_i32_1 = arith.constant 0 : i32
    return %arg0, %c0_i32, %c0_i32_0 : i32, i32, i32
  }
  func.func @transform_1(%arg0: i32) -> (i32, i32) {
    %c0_i32 = arith.constant 0 : i32
    %c0_i32_0 = arith.constant 0 : i32
    %c0_i32_1 = arith.constant 0 : i32
    return %c0_i32, %c0_i32_0 : i32, i32
  }
  func.func @transform_2(%arg0: i32) -> (i32, i32) {
    %c0_i32 = arith.constant 0 : i32
    %c0_i32_0 = arith.constant 0 : i32
    %c0_i32_1 = arith.constant 0 : i32
    return %c0_i32, %c0_i32_0 : i32, i32
  }
  func.func @transform_3(%arg0: i32) -> (i32, i32) {
    %c0_i32 = arith.constant 0 : i32
    %c0_i32_0 = arith.constant 0 : i32
    %c0_i32_1 = arith.constant 0 : i32
    return %c0_i32, %c0_i32_0 : i32, i32
  }
  func.func @transform_4(%arg0: i32) -> (i32, i32, i32, i32) {
    %c0_i32 = arith.constant 0 : i32
    %c0_i32_0 = arith.constant 0 : i32
    %c0_i32_1 = arith.constant 0 : i32
    %c0_i32_2 = arith.constant 0 : i32
    return %arg0, %c0_i32, %c0_i32_0, %c0_i32_1 : i32, i32, i32, i32
  }
}

module attributes {stable_mosaic.version = 11 : i64} {
  func.func @_clstm_layer_kernel(%arg0: i32, %arg1: memref<1x72x64xf32, #tpu.memory_space<vmem>>, %arg2: memref<32x72xf32, #tpu.memory_space<vmem>>, %arg3: memref<32x72xf32, #tpu.memory_space<vmem>>, %arg4: memref<32x1xf32, #tpu.memory_space<vmem>>, %arg5: memref<1x2x8x32xf32, #tpu.memory_space<vmem>>) attributes {dimension_semantics = [#tpu.dimension_semantics<parallel>], iteration_bounds = array<i64: 2>, scalar_prefetch = 0 : i64, scratch_operands = 0 : i64, tpu.core_type = #tpu.core_type<tc>, window_params = [{transform_indices = @transform_0, window_bounds = array<i64: 1, 72, 64>}, {pipeline_mode = #tpu.pipeline_mode<synchronous>, transform_indices = @transform_1, window_bounds = array<i64: 32, 72>}, {pipeline_mode = #tpu.pipeline_mode<synchronous>, transform_indices = @transform_2, window_bounds = array<i64: 32, 72>}, {pipeline_mode = #tpu.pipeline_mode<synchronous>, transform_indices = @transform_3, window_bounds = array<i64: 32, 1>}, {transform_indices = @transform_4, window_bounds = array<i64: 1, 2, 8, 32>}]} {
    %0 = tpu.iota {dimensions = array<i32: 1>} : vector<8x32xi32>
    %c8_i32 = arith.constant 8 : i32
    %c0_i32 = arith.constant 0 : i32
    %1 = arith.cmpi eq, %c8_i32, %c0_i32 : i32
    %c1_i32 = arith.constant 1 : i32
    %2 = arith.select %1, %c1_i32, %c8_i32 : i32
    %3 = vector.broadcast %2 : i32 to vector<8x32xi32>
    %4 = arith.remsi %0, %3 : vector<8x32xi32>
    %c0_i32_0 = arith.constant 0 : i32
    %5 = vector.broadcast %c0_i32_0 : i32 to vector<8x32xi32>
    %6 = arith.cmpi ne, %4, %5 : vector<8x32xi32>
    %c0_i32_1 = arith.constant 0 : i32
    %7 = vector.broadcast %c0_i32_1 : i32 to vector<8x32xi32>
    %8 = arith.cmpi slt, %4, %7 : vector<8x32xi32>
    %c0_i32_2 = arith.constant 0 : i32
    %9 = arith.cmpi slt, %2, %c0_i32_2 : i32
    %10 = vector.broadcast %9 : i1 to vector<8x32xi1>
    %11 = vector.broadcast %10 : vector<8x32xi1> to vector<8x32xi1>
    %12 = arith.xori %8, %11 : vector<8x32xi1>
    %13 = arith.andi %12, %6 : vector<8x32xi1>
    %14 = vector.broadcast %2 : i32 to vector<8x32xi32>
    %15 = arith.addi %4, %14 : vector<8x32xi32>
    %16 = arith.select %13, %15, %4 : vector<8x32xi1>, vector<8x32xi32>
    %c0 = arith.constant 0 : index
    %c0_3 = arith.constant 0 : index
    %17 = vector.load %arg2[%c0, %c0_3] : memref<32x72xf32, #tpu.memory_space<vmem>>, vector<32x72xf32>
    %c0_4 = arith.constant 0 : index
    %c0_5 = arith.constant 0 : index
    %c0_6 = arith.constant 0 : index
    %18 = vector.load %arg1[%c0_4, %c0_5, %c0_6] : memref<1x72x64xf32, #tpu.memory_space<vmem>>, vector<1x72x64xf32>
    %19 = vector.shape_cast %18 : vector<1x72x64xf32> to vector<72x64xf32>
    %cst = arith.constant dense<0.000000e+00> : vector<32x64xf32>
    %20 = tpu.matmul %17, %19, %cst {dimension_numbers = #tpu.dot_dimension_numbers<[1], [0], [0], [1], [0, 0, 1, 1], [], []>} : vector<32x72xf32>, vector<72x64xf32>, vector<32x64xf32> -> vector<32x64xf32>
    %c0_7 = arith.constant 0 : index
    %c0_8 = arith.constant 0 : index
    %21 = vector.load %arg4[%c0_7, %c0_8] : memref<32x1xf32, #tpu.memory_space<vmem>>, vector<32x1xf32>
    %22 = vector.broadcast %21 : vector<32x1xf32> to vector<32x64xf32>
    %23 = arith.addf %20, %22 : vector<32x64xf32>
    %cst_9 = arith.constant 0.000000e+00 : f32
    %24 = vector.broadcast %cst_9 : f32 to vector<8x32xf32>
    %25 = vector.extract_strided_slice %23 {offsets = [0, 0], sizes = [32, 32], strides = [1, 1]} : vector<32x64xf32> to vector<32x32xf32>
    %26 = vector.extract_strided_slice %25 {offsets = [0, 0], sizes = [24, 32], strides = [1, 1]} : vector<32x32xf32> to vector<24x32xf32>
    %cst_10 = arith.constant 5.000000e-01 : f32
    %27 = vector.broadcast %cst_10 : f32 to vector<24x32xf32>
    %28 = arith.mulf %27, %26 : vector<24x32xf32>
    %29 = math.tanh %28 : vector<24x32xf32>
    %30 = vector.extract_strided_slice %29 {offsets = [0, 0], sizes = [8, 32], strides = [1, 1]} : vector<24x32xf32> to vector<8x32xf32>
    %cst_11 = arith.constant 5.000000e-01 : f32
    %31 = vector.broadcast %cst_11 : f32 to vector<8x32xf32>
    %32 = arith.mulf %31, %30 : vector<8x32xf32>
    %cst_12 = arith.constant 5.000000e-01 : f32
    %33 = vector.broadcast %cst_12 : f32 to vector<8x32xf32>
    %34 = arith.addf %32, %33 : vector<8x32xf32>
    %35 = vector.extract_strided_slice %29 {offsets = [8, 0], sizes = [8, 32], strides = [1, 1]} : vector<24x32xf32> to vector<8x32xf32>
    %cst_13 = arith.constant 5.000000e-01 : f32
    %36 = vector.broadcast %cst_13 : f32 to vector<8x32xf32>
    %37 = arith.mulf %36, %35 : vector<8x32xf32>
    %cst_14 = arith.constant 5.000000e-01 : f32
    %38 = vector.broadcast %cst_14 : f32 to vector<8x32xf32>
    %39 = arith.addf %37, %38 : vector<8x32xf32>
    %40 = vector.extract_strided_slice %29 {offsets = [16, 0], sizes = [8, 32], strides = [1, 1]} : vector<24x32xf32> to vector<8x32xf32>
    %cst_15 = arith.constant 5.000000e-01 : f32
    %41 = vector.broadcast %cst_15 : f32 to vector<8x32xf32>
    %42 = arith.mulf %41, %40 : vector<8x32xf32>
    %cst_16 = arith.constant 5.000000e-01 : f32
    %43 = vector.broadcast %cst_16 : f32 to vector<8x32xf32>
    %44 = arith.addf %42, %43 : vector<8x32xf32>
    %45 = vector.extract_strided_slice %25 {offsets = [24, 0], sizes = [8, 32], strides = [1, 1]} : vector<32x32xf32> to vector<8x32xf32>
    %46 = math.tanh %45 : vector<8x32xf32>
    %47 = arith.mulf %39, %24 : vector<8x32xf32>
    %48 = arith.mulf %34, %46 : vector<8x32xf32>
    %49 = arith.addf %47, %48 : vector<8x32xf32>
    %50 = math.tanh %49 : vector<8x32xf32>
    %51 = arith.mulf %44, %50 : vector<8x32xf32>
    %c0_17 = arith.constant 0 : index
    %c0_18 = arith.constant 0 : index
    %c0_19 = arith.constant 0 : index
    %c0_20 = arith.constant 0 : index
    %52 = vector.load %arg5[%c0_17, %c0_18, %c0_19, %c0_20] : memref<1x2x8x32xf32, #tpu.memory_space<vmem>>, vector<1x1x8x32xf32>
    %53 = vector.shape_cast %52 : vector<1x1x8x32xf32> to vector<8x32xf32>
    %54 = vector.shape_cast %51 : vector<8x32xf32> to vector<1x1x8x32xf32>
    tpu.vector_store %arg5[%c0_17, %c0_18, %c0_19, %c0_20], %54 {strides = array<i32>} : memref<1x2x8x32xf32, #tpu.memory_space<vmem>>, vector<1x1x8x32xf32>,
    %55 = vector.extract_strided_slice %23 {offsets = [0, 32], sizes = [32, 32], strides = [1, 1]} : vector<32x64xf32> to vector<32x32xf32>
    %cst_21 = arith.constant 0.000000e+00 : f32
    %56 = vector.broadcast %cst_21 : f32 to vector<8x9xf32>
    %57 = vector.extract_strided_slice %51 {offsets = [0, 0], sizes = [8, 23], strides = [1, 1]} : vector<8x32xf32> to vector<8x23xf32>
    %58 = tpu.concatenate %56, %57 in 1 : vector<8x9xf32>, vector<8x23xf32> -> vector<8x32xf32>
    %c1_i32_22 = arith.constant 1 : i32
    %59 = vector.broadcast %c1_i32_22 : i32 to vector<8x32xi32>
    %60 = arith.cmpi sge, %16, %59 : vector<8x32xi32>
    %cst_23 = arith.constant 0.000000e+00 : f32
    %61 = vector.broadcast %cst_23 : f32 to vector<8x32xf32>
    %62 = arith.select %60, %58, %61 : vector<8x32xi1>, vector<8x32xf32>
    %cst_24 = arith.constant 0.000000e+00 : f32
    %63 = vector.broadcast %cst_24 : f32 to vector<8x8xf32>
    %64 = vector.extract_strided_slice %51 {offsets = [0, 0], sizes = [8, 24], strides = [1, 1]} : vector<8x32xf32> to vector<8x24xf32>
    %65 = tpu.concatenate %63, %64 in 1 : vector<8x8xf32>, vector<8x24xf32> -> vector<8x32xf32>
    %cst_25 = arith.constant 0.000000e+00 : f32
    %66 = vector.broadcast %cst_25 : f32 to vector<8x7xf32>
    %67 = vector.extract_strided_slice %51 {offsets = [0, 0], sizes = [8, 25], strides = [1, 1]} : vector<8x32xf32> to vector<8x25xf32>
    %68 = tpu.concatenate %66, %67 in 1 : vector<8x7xf32>, vector<8x25xf32> -> vector<8x32xf32>
    %c7_i32 = arith.constant 7 : i32
    %69 = vector.broadcast %c7_i32 : i32 to vector<8x32xi32>
    %70 = arith.cmpi slt, %16, %69 : vector<8x32xi32>
    %cst_26 = arith.constant 0.000000e+00 : f32
    %71 = vector.broadcast %cst_26 : f32 to vector<8x32xf32>
    %72 = arith.select %70, %68, %71 : vector<8x32xi1>, vector<8x32xf32>
    %cst_27 = arith.constant 0.000000e+00 : f32
    %73 = vector.broadcast %cst_27 : f32 to vector<8x1xf32>
    %74 = vector.extract_strided_slice %51 {offsets = [0, 0], sizes = [8, 31], strides = [1, 1]} : vector<8x32xf32> to vector<8x31xf32>
    %75 = tpu.concatenate %73, %74 in 1 : vector<8x1xf32>, vector<8x31xf32> -> vector<8x32xf32>
    %c1_i32_28 = arith.constant 1 : i32
    %76 = vector.broadcast %c1_i32_28 : i32 to vector<8x32xi32>
    %77 = arith.cmpi sge, %16, %76 : vector<8x32xi32>
    %cst_29 = arith.constant 0.000000e+00 : f32
    %78 = vector.broadcast %cst_29 : f32 to vector<8x32xf32>
    %79 = arith.select %77, %75, %78 : vector<8x32xi1>, vector<8x32xf32>
    %cst_30 = arith.constant 0.000000e+00 : f32
    %80 = vector.broadcast %cst_30 : f32 to vector<8x1xf32>
    %81 = vector.extract_strided_slice %51 {offsets = [0, 1], sizes = [8, 31], strides = [1, 1]} : vector<8x32xf32> to vector<8x31xf32>
    %82 = tpu.concatenate %81, %80 in 1 : vector<8x31xf32>, vector<8x1xf32> -> vector<8x32xf32>
    %c7_i32_31 = arith.constant 7 : i32
    %83 = vector.broadcast %c7_i32_31 : i32 to vector<8x32xi32>
    %84 = arith.cmpi slt, %16, %83 : vector<8x32xi32>
    %cst_32 = arith.constant 0.000000e+00 : f32
    %85 = vector.broadcast %cst_32 : f32 to vector<8x32xf32>
    %86 = arith.select %84, %82, %85 : vector<8x32xi1>, vector<8x32xf32>
    %cst_33 = arith.constant 0.000000e+00 : f32
    %87 = vector.broadcast %cst_33 : f32 to vector<8x7xf32>
    %88 = vector.extract_strided_slice %51 {offsets = [0, 7], sizes = [8, 25], strides = [1, 1]} : vector<8x32xf32> to vector<8x25xf32>
    %89 = tpu.concatenate %88, %87 in 1 : vector<8x25xf32>, vector<8x7xf32> -> vector<8x32xf32>
    %c1_i32_34 = arith.constant 1 : i32
    %90 = vector.broadcast %c1_i32_34 : i32 to vector<8x32xi32>
    %91 = arith.cmpi sge, %16, %90 : vector<8x32xi32>
    %cst_35 = arith.constant 0.000000e+00 : f32
    %92 = vector.broadcast %cst_35 : f32 to vector<8x32xf32>
    %93 = arith.select %91, %89, %92 : vector<8x32xi1>, vector<8x32xf32>
    %cst_36 = arith.constant 0.000000e+00 : f32
    %94 = vector.broadcast %cst_36 : f32 to vector<8x8xf32>
    %95 = vector.extract_strided_slice %51 {offsets = [0, 8], sizes = [8, 24], strides = [1, 1]} : vector<8x32xf32> to vector<8x24xf32>
    %96 = tpu.concatenate %95, %94 in 1 : vector<8x24xf32>, vector<8x8xf32> -> vector<8x32xf32>
    %cst_37 = arith.constant 0.000000e+00 : f32
    %97 = vector.broadcast %cst_37 : f32 to vector<8x9xf32>
    %98 = vector.extract_strided_slice %51 {offsets = [0, 9], sizes = [8, 23], strides = [1, 1]} : vector<8x32xf32> to vector<8x23xf32>
    %99 = tpu.concatenate %98, %97 in 1 : vector<8x23xf32>, vector<8x9xf32> -> vector<8x32xf32>
    %c7_i32_38 = arith.constant 7 : i32
    %100 = vector.broadcast %c7_i32_38 : i32 to vector<8x32xi32>
    %101 = arith.cmpi slt, %16, %100 : vector<8x32xi32>
    %cst_39 = arith.constant 0.000000e+00 : f32
    %102 = vector.broadcast %cst_39 : f32 to vector<8x32xf32>
    %103 = arith.select %101, %99, %102 : vector<8x32xi1>, vector<8x32xf32>
    %104 = tpu.concatenate %62, %65, %72, %79, %51, %86, %93, %96, %103 in 0 : vector<8x32xf32>, vector<8x32xf32>, vector<8x32xf32>, vector<8x32xf32>, vector<8x32xf32>, vector<8x32xf32>, vector<8x32xf32>, vector<8x32xf32>, vector<8x32xf32> -> vector<72x32xf32>
    %c0_40 = arith.constant 0 : index
    %c0_41 = arith.constant 0 : index
    %105 = vector.load %arg3[%c0_40, %c0_41] : memref<32x72xf32, #tpu.memory_space<vmem>>, vector<32x72xf32>
    %cst_42 = arith.constant dense<0.000000e+00> : vector<32x32xf32>
    %106 = tpu.matmul %105, %104, %cst_42 {dimension_numbers = #tpu.dot_dimension_numbers<[1], [0], [0], [1], [0, 0, 1, 1], [], []>} : vector<32x72xf32>, vector<72x32xf32>, vector<32x32xf32> -> vector<32x32xf32>
    %107 = arith.addf %55, %106 : vector<32x32xf32>
    %108 = vector.extract_strided_slice %107 {offsets = [0, 0], sizes = [24, 32], strides = [1, 1]} : vector<32x32xf32> to vector<24x32xf32>
    %cst_43 = arith.constant 5.000000e-01 : f32
    %109 = vector.broadcast %cst_43 : f32 to vector<24x32xf32>
    %110 = arith.mulf %109, %108 : vector<24x32xf32>
    %111 = math.tanh %110 : vector<24x32xf32>
    %112 = vector.extract_strided_slice %111 {offsets = [0, 0], sizes = [8, 32], strides = [1, 1]} : vector<24x32xf32> to vector<8x32xf32>
    %cst_44 = arith.constant 5.000000e-01 : f32
    %113 = vector.broadcast %cst_44 : f32 to vector<8x32xf32>
    %114 = arith.mulf %113, %112 : vector<8x32xf32>
    %cst_45 = arith.constant 5.000000e-01 : f32
    %115 = vector.broadcast %cst_45 : f32 to vector<8x32xf32>
    %116 = arith.addf %114, %115 : vector<8x32xf32>
    %117 = vector.extract_strided_slice %111 {offsets = [8, 0], sizes = [8, 32], strides = [1, 1]} : vector<24x32xf32> to vector<8x32xf32>
    %cst_46 = arith.constant 5.000000e-01 : f32
    %118 = vector.broadcast %cst_46 : f32 to vector<8x32xf32>
    %119 = arith.mulf %118, %117 : vector<8x32xf32>
    %cst_47 = arith.constant 5.000000e-01 : f32
    %120 = vector.broadcast %cst_47 : f32 to vector<8x32xf32>
    %121 = arith.addf %119, %120 : vector<8x32xf32>
    %122 = vector.extract_strided_slice %111 {offsets = [16, 0], sizes = [8, 32], strides = [1, 1]} : vector<24x32xf32> to vector<8x32xf32>
    %cst_48 = arith.constant 5.000000e-01 : f32
    %123 = vector.broadcast %cst_48 : f32 to vector<8x32xf32>
    %124 = arith.mulf %123, %122 : vector<8x32xf32>
    %cst_49 = arith.constant 5.000000e-01 : f32
    %125 = vector.broadcast %cst_49 : f32 to vector<8x32xf32>
    %126 = arith.addf %124, %125 : vector<8x32xf32>
    %127 = vector.extract_strided_slice %107 {offsets = [24, 0], sizes = [8, 32], strides = [1, 1]} : vector<32x32xf32> to vector<8x32xf32>
    %128 = math.tanh %127 : vector<8x32xf32>
    %129 = arith.mulf %121, %49 : vector<8x32xf32>
    %130 = arith.mulf %116, %128 : vector<8x32xf32>
    %131 = arith.addf %129, %130 : vector<8x32xf32>
    %132 = math.tanh %131 : vector<8x32xf32>
    %133 = arith.mulf %126, %132 : vector<8x32xf32>
    %c0_50 = arith.constant 0 : index
    %c1 = arith.constant 1 : index
    %c0_51 = arith.constant 0 : index
    %c0_52 = arith.constant 0 : index
    %134 = vector.load %arg5[%c0_50, %c1, %c0_51, %c0_52] : memref<1x2x8x32xf32, #tpu.memory_space<vmem>>, vector<1x1x8x32xf32>
    %135 = vector.shape_cast %134 : vector<1x1x8x32xf32> to vector<8x32xf32>
    %136 = vector.shape_cast %133 : vector<8x32xf32> to vector<1x1x8x32xf32>
    tpu.vector_store %arg5[%c0_50, %c1, %c0_51, %c0_52], %136 {strides = array<i32>} : memref<1x2x8x32xf32, #tpu.memory_space<vmem>>, vector<1x1x8x32xf32>,
    return
  }
  func.func @transform_0(%arg0: i32) -> (i32, i32, i32) {
    %c0_i32 = arith.constant 0 : i32
    %c0_i32_0 = arith.constant 0 : i32
    %c0_i32_1 = arith.constant 0 : i32
    return %arg0, %c0_i32, %c0_i32_0 : i32, i32, i32
  }
  func.func @transform_1(%arg0: i32) -> (i32, i32) {
    %c0_i32 = arith.constant 0 : i32
    %c0_i32_0 = arith.constant 0 : i32
    %c0_i32_1 = arith.constant 0 : i32
    return %c0_i32, %c0_i32_0 : i32, i32
  }
  func.func @transform_2(%arg0: i32) -> (i32, i32) {
    %c0_i32 = arith.constant 0 : i32
    %c0_i32_0 = arith.constant 0 : i32
    %c0_i32_1 = arith.constant 0 : i32
    return %c0_i32, %c0_i32_0 : i32, i32
  }
  func.func @transform_3(%arg0: i32) -> (i32, i32) {
    %c0_i32 = arith.constant 0 : i32
    %c0_i32_0 = arith.constant 0 : i32
    %c0_i32_1 = arith.constant 0 : i32
    return %c0_i32, %c0_i32_0 : i32, i32
  }
  func.func @transform_4(%arg0: i32) -> (i32, i32, i32, i32) {
    %c0_i32 = arith.constant 0 : i32
    %c0_i32_0 = arith.constant 0 : i32
    %c0_i32_1 = arith.constant 0 : i32
    %c0_i32_2 = arith.constant 0 : i32
    return %arg0, %c0_i32, %c0_i32_0, %c0_i32_1 : i32, i32, i32, i32
  }
}

module attributes {stable_mosaic.version = 11 : i64} {
  func.func @_head_kernel(%arg0: memref<2x64xf32, #tpu.memory_space<vmem>>, %arg1: memref<64x16xf32, #tpu.memory_space<vmem>>, %arg2: memref<1x16xf32, #tpu.memory_space<vmem>>, %arg3: memref<16x16xf32, #tpu.memory_space<vmem>>, %arg4: memref<1x16xf32, #tpu.memory_space<vmem>>, %arg5: memref<16x12xf32, #tpu.memory_space<vmem>>, %arg6: memref<1x12xf32, #tpu.memory_space<vmem>>, %arg7: memref<2x12xf32, #tpu.memory_space<vmem>>) attributes {dimension_semantics = [], scalar_prefetch = 0 : i64, scratch_operands = 0 : i64, tpu.core_type = #tpu.core_type<tc>} {
    %c0 = arith.constant 0 : index
    %c0_0 = arith.constant 0 : index
    %0 = vector.load %arg0[%c0, %c0_0] : memref<2x64xf32, #tpu.memory_space<vmem>>, vector<2x64xf32>
    %c0_1 = arith.constant 0 : index
    %c0_2 = arith.constant 0 : index
    %1 = vector.load %arg1[%c0_1, %c0_2] : memref<64x16xf32, #tpu.memory_space<vmem>>, vector<64x16xf32>
    %cst = arith.constant dense<0.000000e+00> : vector<2x16xf32>
    %2 = tpu.matmul %0, %1, %cst {dimension_numbers = #tpu.dot_dimension_numbers<[1], [0], [0], [1], [0, 0, 1, 1], [], []>} : vector<2x64xf32>, vector<64x16xf32>, vector<2x16xf32> -> vector<2x16xf32>
    %c0_3 = arith.constant 0 : index
    %c0_4 = arith.constant 0 : index
    %3 = vector.load %arg2[%c0_3, %c0_4] : memref<1x16xf32, #tpu.memory_space<vmem>>, vector<1x16xf32>
    %4 = vector.broadcast %3 : vector<1x16xf32> to vector<2x16xf32>
    %5 = arith.addf %2, %4 : vector<2x16xf32>
    %cst_5 = arith.constant 0.000000e+00 : f32
    %6 = vector.broadcast %cst_5 : f32 to vector<2x16xf32>
    %7 = arith.cmpf ogt, %5, %6 : vector<2x16xf32>
    %cst_6 = arith.constant 0.000000e+00 : f32
    %8 = vector.broadcast %cst_6 : f32 to vector<2x16xf32>
    %9 = arith.minimumf %5, %8 : vector<2x16xf32>
    %10 = math.exp %9 : vector<2x16xf32>
    %cst_7 = arith.constant 1.000000e+00 : f32
    %11 = vector.broadcast %cst_7 : f32 to vector<2x16xf32>
    %12 = arith.subf %10, %11 : vector<2x16xf32>
    %13 = arith.select %7, %5, %12 : vector<2x16xi1>, vector<2x16xf32>
    %c0_8 = arith.constant 0 : index
    %c0_9 = arith.constant 0 : index
    %14 = vector.load %arg3[%c0_8, %c0_9] : memref<16x16xf32, #tpu.memory_space<vmem>>, vector<16x16xf32>
    %cst_10 = arith.constant dense<0.000000e+00> : vector<2x16xf32>
    %15 = tpu.matmul %13, %14, %cst_10 {dimension_numbers = #tpu.dot_dimension_numbers<[1], [0], [0], [1], [0, 0, 1, 1], [], []>} : vector<2x16xf32>, vector<16x16xf32>, vector<2x16xf32> -> vector<2x16xf32>
    %c0_11 = arith.constant 0 : index
    %c0_12 = arith.constant 0 : index
    %16 = vector.load %arg4[%c0_11, %c0_12] : memref<1x16xf32, #tpu.memory_space<vmem>>, vector<1x16xf32>
    %17 = vector.broadcast %16 : vector<1x16xf32> to vector<2x16xf32>
    %18 = arith.addf %15, %17 : vector<2x16xf32>
    %cst_13 = arith.constant 0.000000e+00 : f32
    %19 = vector.broadcast %cst_13 : f32 to vector<2x16xf32>
    %20 = arith.cmpf ogt, %18, %19 : vector<2x16xf32>
    %cst_14 = arith.constant 0.000000e+00 : f32
    %21 = vector.broadcast %cst_14 : f32 to vector<2x16xf32>
    %22 = arith.minimumf %18, %21 : vector<2x16xf32>
    %23 = math.exp %22 : vector<2x16xf32>
    %cst_15 = arith.constant 1.000000e+00 : f32
    %24 = vector.broadcast %cst_15 : f32 to vector<2x16xf32>
    %25 = arith.subf %23, %24 : vector<2x16xf32>
    %26 = arith.select %20, %18, %25 : vector<2x16xi1>, vector<2x16xf32>
    %c0_16 = arith.constant 0 : index
    %c0_17 = arith.constant 0 : index
    %27 = vector.load %arg5[%c0_16, %c0_17] : memref<16x12xf32, #tpu.memory_space<vmem>>, vector<16x12xf32>
    %cst_18 = arith.constant dense<0.000000e+00> : vector<2x12xf32>
    %28 = tpu.matmul %26, %27, %cst_18 {dimension_numbers = #tpu.dot_dimension_numbers<[1], [0], [0], [1], [0, 0, 1, 1], [], []>} : vector<2x16xf32>, vector<16x12xf32>, vector<2x12xf32> -> vector<2x12xf32>
    %c0_19 = arith.constant 0 : index
    %c0_20 = arith.constant 0 : index
    %29 = vector.load %arg6[%c0_19, %c0_20] : memref<1x12xf32, #tpu.memory_space<vmem>>, vector<1x12xf32>
    %30 = vector.broadcast %29 : vector<1x12xf32> to vector<2x12xf32>
    %31 = arith.addf %28, %30 : vector<2x12xf32>
    %c0_21 = arith.constant 0 : index
    %c0_22 = arith.constant 0 : index
    %32 = vector.load %arg7[%c0_21, %c0_22] : memref<2x12xf32, #tpu.memory_space<vmem>>, vector<2x12xf32>
    tpu.vector_store %arg7[%c0_21, %c0_22], %31 {strides = array<i32>} : memref<2x12xf32, #tpu.memory_space<vmem>>, vector<2x12xf32>,
    return
  }
}

</mosaic_0001>

<llo_original>
// kernel: net_forward.3
$region0: #{net_forward.3}
  #allocation0 [shape = 'u32[]', space=smem, size = 0x4, offset = 0x4, fixed_abs, tag = 'smem constant byte address 0x4 - core index']
  #allocation1 [shape = 'u32[144,128]{1,0:T(1,128)}', space=vmem, size = 0x12000, scoped, tag = 'internal scratch']
  %s0 = inlined_call_operand.vmem [shape: f32[2,18,512], index: 0, kind: input, shape index: {}]
  %s1 = inlined_call_operand.vmem [shape: f32[32,18], index: 1, kind: input, shape index: {}]
  %s2 = inlined_call_operand.vmem [shape: f32[32,72], index: 2, kind: input, shape index: {}]
  %s3 = inlined_call_operand.vmem [shape: f32[32,1], index: 3, kind: input, shape index: {}]
  %s4 = inlined_call_operand.vmem [shape: f32[2,4,8,128], index: 4, kind: output, shape index: {}]
  %s5 = sld [smem:[#allocation0]]
  $region49: #{net_forward.3} parent=0
    _
  %s7 = ssub.s32 1, %s5
  %s8 = scalar_select 0, %s7, %s5
  loop: start=0, step=1, limit=4
  $region2: #{net_forward.3} parent=0 // loop_pre_header
    _
  $region3: #{net_forward.3} parent=0 // loop_header
    %s10 = sphi 0, %s14
    %p11 = scmp.ge.s32.totalorder %s10, 4
    %s20 = sphi 0, %s22
    %s23 = sphi 0, %s20
    %s24 = sphi 0, %s23
    %s40 = sphi 0, %s24
    %s44 = sphi 0, %s44
    %s46 = sphi 0, %s44
    %s47 = sphi 0, %s46
    %s61 = sphi 0, %s47
    %s65 = sphi 0, %s65
    %s67 = sphi 0, %s65
    %s68 = sphi 0, %s67
    %s82 = sphi 0, %s68
    %s86 = sphi 0, %s86
    %s88 = sphi 0, %s86
    %s89 = sphi 0, %s88
    %s103 = sphi 0, %s89
    %s109 = sphi 0, %s111
    %s112 = sphi 0, %s109
    %s113 = sphi 0, %s112
    %s129 = sphi 0, %s113
  $region4: #{net_forward.3} parent=0 // loop_header_branch
    %13 = sbr.rel (%p11) target = $region8
  $region5: #{net_forward.3} parent=0 // loop_body
    %s15 = ssub.s32 %s10, 1
    %s16 = ssub.s32 %s10, 2
    %s17 = sadd.s32 %s10, 1
    %s18 = ssub.s32 %s10, %s17
    %p19 = scmp.eq.s32.totalorder %s18, 0
    %s21 = sadd.s32 %s20, 1
    %s22 = scalar_select %p19, %s20, %s21
    %p25 = pneg %p19
    %p26 = scmp.eq.s32.totalorder %s10, 1
    %p27 = por %p25, %p26
    %p28 = scmp.ne.s32.totalorder %s20, %s23
    %p29 = scmp.eq.s32.totalorder %s10, 0
    %p30 = por %p28, %p29
    %p31 = scmp.ne.s32.totalorder %s20, %s23
    %p32 = scmp.eq.s32.totalorder %s15, 1
    %p33 = por %p31, %p32
    %p34 = scmp.ne.s32.totalorder %s23, %s24
    %p35 = scmp.eq.s32.totalorder %s15, 0
    %p36 = por %p34, %p35
    %p37 = scmp.ne.s32.totalorder %s23, %s24
    %p38 = scmp.eq.s32.totalorder %s16, 1
    %p39 = por %p37, %p38
    %p41 = scmp.ne.s32.totalorder %s24, %s40
    %p42 = scmp.eq.s32.totalorder %s16, 0
    %p43 = por %p41, %p42
    %s45 = sadd.s32 %s44, 1
    %p48 = scmp.eq.s32.totalorder %s10, 1
    %p49 = scmp.ne.s32.totalorder %s44, %s46
    %p50 = scmp.eq.s32.totalorder %s10, 0
    %p51 = por %p49, %p50
    %p52 = scmp.ne.s32.totalorder %s44, %s46
    %p53 = scmp.eq.s32.totalorder %s15, 1
    %p54 = por %p52, %p53
    %p55 = scmp.ne.s32.totalorder %s46, %s47
    %p56 = scmp.eq.s32.totalorder %s15, 0
    %p57 = por %p55, %p56
    %p58 = scmp.ne.s32.totalorder %s46, %s47
    %p59 = scmp.eq.s32.totalorder %s16, 1
    %p60 = por %p58, %p59
    %p62 = scmp.ne.s32.totalorder %s47, %s61
    %p63 = scmp.eq.s32.totalorder %s16, 0
    %p64 = por %p62, %p63
    %s66 = sadd.s32 %s65, 1
    %p69 = scmp.eq.s32.totalorder %s10, 1
    %p70 = scmp.ne.s32.totalorder %s65, %s67
    %p71 = scmp.eq.s32.totalorder %s10, 0
    %p72 = por %p70, %p71
    %p73 = scmp.ne.s32.totalorder %s65, %s67
    %p74 = scmp.eq.s32.totalorder %s15, 1
    %p75 = por %p73, %p74
    %p76 = scmp.ne.s32.totalorder %s67, %s68
    %p77 = scmp.eq.s32.totalorder %s15, 0
    %p78 = por %p76, %p77
    %p79 = scmp.ne.s32.totalorder %s67, %s68
    %p80 = scmp.eq.s32.totalorder %s16, 1
    %p81 = por %p79, %p80
    %p83 = scmp.ne.s32.totalorder %s68, %s82
    %p84 = scmp.eq.s32.totalorder %s16, 0
    %p85 = por %p83, %p84
    %s87 = sadd.s32 %s86, 1
    %p90 = scmp.eq.s32.totalorder %s10, 1
    %p91 = scmp.ne.s32.totalorder %s86, %s88
    %p92 = scmp.eq.s32.totalorder %s10, 0
    %p93 = por %p91, %p92
    %p94 = scmp.ne.s32.totalorder %s86, %s88
    %p95 = scmp.eq.s32.totalorder %s15, 1
    %p96 = por %p94, %p95
    %p97 = scmp.ne.s32.totalorder %s88, %s89
    %p98 = scmp.eq.s32.totalorder %s15, 0
    %p99 = por %p97, %p98
    %p100 = scmp.ne.s32.totalorder %s88, %s89
    %p101 = scmp.eq.s32.totalorder %s16, 1
    %p102 = por %p100, %p101
    %p104 = scmp.ne.s32.totalorder %s89, %s103
    %p105 = scmp.eq.s32.totalorder %s16, 0
    %p106 = por %p104, %p105
    %s107 = ssub.s32 %s10, %s17
    %p108 = scmp.eq.s32.totalorder %s107, 0
    %s110 = sadd.s32 %s109, 1
    %s111 = scalar_select %p108, %s109, %s110
    %p114 = pneg %p108
    %p115 = scmp.eq.s32.totalorder %s10, 1
    %p116 = por %p114, %p115
    %p117 = scmp.ne.s32.totalorder %s109, %s112
    %p118 = scmp.eq.s32.totalorder %s10, 0
    %p119 = por %p117, %p118
    %p120 = scmp.ne.s32.totalorder %s109, %s112
    %p121 = scmp.eq.s32.totalorder %s15, 1
    %p122 = por %p120, %p121
    %p123 = scmp.ne.s32.totalorder %s112, %s113
    %p124 = scmp.eq.s32.totalorder %s15, 0
    %p125 = por %p123, %p124
    %p126 = scmp.ne.s32.totalorder %s112, %s113
    %p127 = scmp.eq.s32.totalorder %s16, 1
    %p128 = por %p126, %p127
    %p130 = scmp.ne.s32.totalorder %s113, %s129
    %p131 = scmp.eq.s32.totalorder %s16, 0
    %p132 = por %p130, %p131
    %p133 = scmp.le.s32.totalorder 1, %s10
    %p134 = scmp.lt.s32.totalorder %s10, 3
    %p135 = pnand %p133, %p134
    %p136 = pneg %p135
    // Predicated region
    $region9: #{net_forward.3} parent=5 // pred_check
      _
    $region10: #{net_forward.3} parent=5 // pred_check_branch
      %138 = sbr.rel (%p135) target = $region12
    $region11: #{net_forward.3} parent=5 // pred_region
      %s139 = ssub.s32 %s10, 1
      // Predicated region
      $region13: #{net_forward.3} parent=11 // pred_check
        %p140 = pneg %p57
      $region14: #{net_forward.3} parent=11 // pred_check_branch
        %142 = sbr.rel (%p140) target = $region16
      $region15: #{net_forward.3} parent=11 // pred_region
        _
      $region16: #{net_forward.3} parent=11 // pred_fallthru
        _
      // Predicated region
      $region17: #{net_forward.3} parent=11 // pred_check
        %p143 = pneg %p78
      $region18: #{net_forward.3} parent=11 // pred_check_branch
        %145 = sbr.rel (%p143) target = $region20
      $region19: #{net_forward.3} parent=11 // pred_region
        _
      $region20: #{net_forward.3} parent=11 // pred_fallthru
        _
      // Predicated region
      $region21: #{net_forward.3} parent=11 // pred_check
        %p146 = pneg %p99
      $region22: #{net_forward.3} parent=11 // pred_check_branch
        %148 = sbr.rel (%p146) target = $region24
      $region23: #{net_forward.3} parent=11 // pred_region
        _
      $region24: #{net_forward.3} parent=11 // pred_fallthru
        _
    $region12: #{net_forward.3} parent=5 // pred_fallthru
      _
    %p149 = scmp.lt.s32.totalorder %s10, 2
    // Predicated region
    $region25: #{net_forward.3} parent=5 // pred_check
      %p150 = pneg %p149
    $region26: #{net_forward.3} parent=5 // pred_check_branch
      %152 = sbr.rel (%p150) target = $region28
    $region27: #{net_forward.3} parent=5 // pred_region
      // Predicated region
      $region29: #{net_forward.3} parent=27 // pred_check
        %p153 = pneg %p30
      $region30: #{net_forward.3} parent=27 // pred_check_branch
        %155 = sbr.rel (%p153) target = $region32
      $region31: #{net_forward.3} parent=27 // pred_region
        %p156 = scmp.lt.s32.totalorder %s10, 1
        %s157 = scalar_select %p156, %s10, 1
        %s158 = smul.addr %s157, 12
        %s159 = smul.addr %s158, 8
        %s160 = scalar_lea.vmem %s0, %s159
      $region32: #{net_forward.3} parent=27 // pred_fallthru
        _
    $region28: #{net_forward.3} parent=5 // pred_fallthru
      _
    %p161 = scmp.le.s32.totalorder 1, %s10
    %p162 = scmp.lt.s32.totalorder %s10, 3
    %p163 = pnand %p161, %p162
    %p164 = pneg %p163
    // Predicated region
    $region33: #{net_forward.3} parent=5 // pred_check
      _
    $region34: #{net_forward.3} parent=5 // pred_check_branch
      %166 = sbr.rel (%p163) target = $region36
    $region35: #{net_forward.3} parent=5 // pred_region
      %s167 = ssub.s32 %s10, 1
      %p168 = scmp.lt.s32.totalorder %s15, 1
      %s169 = scalar_select %p168, %s15, 1
      %s170 = smul.addr %s169, 12
      %s171 = smul.addr %s170, 8
      %s172 = scalar_lea.vmem %s0, %s171
      %p173 = pneg %p36
      %p174 = pneg %p33
      %p175 = pneg %p57
      %p176 = pneg %p54
      %p177 = pneg %p78
      %p178 = pneg %p75
      %p179 = pneg %p99
      %p180 = pneg %p96
      %p181 = pneg %p125
      %p182 = pneg %p122
      %p183 = scmp.lt.s32.totalorder %s15, 1
      %s184 = scalar_select %p183, %s15, 1
      %s185 = smul.addr %s184, 4
      %s186 = smul.addr %s185, 8
      %s187 = scalar_lea.vmem %s4, %s186
      %p188 = scmp.lt.s32.totalorder %s15, 1
      %s189 = scalar_select %p188, %s15, 1
      %s190 = smul.addr %s189, 12
      %s191 = smul.addr %s190, 8
      %s192 = scalar_lea.vmem %s0, %s191
      %p193 = scmp.lt.s32.totalorder %s15, 1
      %s194 = scalar_select %p193, %s15, 1
      %s195 = smul.addr %s194, 4
      %s196 = smul.addr %s195, 8
      %s197 = scalar_lea.vmem %s4, %s196
      %v198 = vlaneseq
      %v199 = vand.u32 %v198, 127
      %vm200 = vcmp.lt.s32.totalorder %v199, 0
      %v201 = vsub.s32 0, %v199
      %v202 = vsel %vm200, %v201, %v199
      %v203 = vshrl.u32 %v202, 4
      %v204 = vand.u32 %v202, 15
      %v205 = vsub.s32 0, %v204
      %v206 = vsel %vm200, %v205, %v204
      %vm207 = vcmp.ne.s32.totalorder %v206, 0
      %vm208 = vcmp.lt.s32.totalorder %v206, 0
      %vm209 = vmand %vm208, %vm207
      %v210 = vadd.s32 %v206, 16
      %v211 = vsel %vm209, %v210, %v206
      %v212 = vld [vmem:[%s1] sm:$0xff]
      %v213 = vld [vmem:[%s1 + $0x8] sm:$0xff]
      %v214 = vld [vmem:[%s1 + $0x10] sm:$0xff]
      %v215 = vld [vmem:[%s1 + $0x18] sm:$0xff]
      %v216 = vld [vmem:[%s192] sm:$0xff]
      %v217 = vld [vmem:[%s192 + $0x8] sm:$0xff]
      %v218 = vld [vmem:[%s192 + $0x10] sm:$0xff]
      %v219 = vld [vmem:[%s192 + $0x18] sm:$0xff]
      %v220 = vld [vmem:[%s192 + $0x20] sm:$0xff]
      %v221 = vld [vmem:[%s192 + $0x28] sm:$0xff]
      %v222 = vld [vmem:[%s192 + $0x30] sm:$0xff]
      %v223 = vld [vmem:[%s192 + $0x38] sm:$0xff]
      %v224 = vld [vmem:[%s192 + $0x40] sm:$0x3]
      %v225 = vld [vmem:[%s192 + $0x48] sm:$0x3]
      %v226 = vld [vmem:[%s192 + $0x50] sm:$0x3]
      %v227 = vld [vmem:[%s192 + $0x58] sm:$0x3]
      %v228 = vld [vmem:[%s3] sm:$0xff]
      %v229 = vld [vmem:[%s3 + $0x8] sm:$0xff]
      %v230 = vld [vmem:[%s3 + $0x10] sm:$0xff]
      %v231 = vld [vmem:[%s3 + $0x18] sm:$0xff]
      %233 = vset.pattern.permute.xlu0 0
      %234 = vperm.xlu0 %233, %v228
      %v235 = vpop.permute.xlu0 %234
      %238 = vset.pattern.permute.xlu0 0
      %239 = vperm.xlu0 %238, %v229
      %v240 = vpop.permute.xlu0 %239
      %243 = vset.pattern.permute.xlu0 0
      %244 = vperm.xlu0 %243, %v230
      %v245 = vpop.permute.xlu0 %244
      %248 = vset.pattern.permute.xlu0 0
      %249 = vperm.xlu0 %248, %v231
      %v250 = vpop.permute.xlu0 %249
      %vm252 = vcmask 146432
      %v254 = vsel %vm252, %v212, 0
      %v257 = vsel %vm252, %v213, 0
      %v260 = vsel %vm252, %v214, 0
      %v263 = vsel %vm252, %v215, 0
      %vm265 = vcmask 1041408
      %v267 = vsel %vm265, %v224, 0
      %v270 = vsel %vm265, %v225, 0
      %v273 = vsel %vm265, %v226, 0
      %v276 = vsel %vm265, %v227, 0
      %278 = vmatprep.subr.mxu0 %v217
      %279 = vmatpush1.msra.mxu0 %v216
      %280 = vmatprep.subr.mxu0 %v221
      %281 = vmatpush1.msra.mxu0 %v220
      %282 = vmatprep.subr.mxu0 %v270
      %283 = vmatpush1.msra.mxu0 %v267
      %284 = vmatprep.subr.mxu0 0.0
      %285 = vmatpush1.msra.mxu0 0.0
      %286 = vmatprep.subr.mxu0 0.0
      %287 = vmatpush1.msra.mxu0 0.0
      %288 = vmatprep.subr.mxu0 0.0
      %289 = vmatpush1.msra.mxu0 0.0
      %290 = vmatprep.subr.mxu0 0.0
      %291 = vmatpush1.msra.mxu0 0.0
      %292 = vmatprep.subr.mxu0 0.0
      %293 = vmatpush1.msra.mxu0 0.0
      %294 = vmatprep.subr.mxu0 0.0
      %295 = vmatpush1.msra.mxu0 0.0
      %296 = vmatprep.subr.mxu0 0.0
      %297 = vmatpush1.msra.mxu0 0.0
      %298 = vmatprep.subr.mxu0 0.0
      %299 = vmatpush1.msra.mxu0 0.0
      %300 = vmatprep.subr.mxu0 0.0
      %301 = vmatpush1.msra.mxu0 0.0
      %302 = vmatprep.subr.mxu0 0.0
      %303 = vmatpush1.msra.mxu0 0.0
      %304 = vmatprep.subr.mxu0 0.0
      %305 = vmatpush1.msra.mxu0 0.0
      %306 = vmatprep.subr.mxu0 0.0
      %307 = vmatpush1.msra.mxu0 0.0
      %308 = vmatprep.subr.mxu0 0.0
      %309 = vmatpush1.msra.mxu0 0.0
      %310 = vmatprep.subr.mxu0 0.0
      %311 = vmatpush1.msra.mxu0 0.0
      %312 = vmatprep.subr.mxu0 0.0
      %313 = vmatpush1.msra.mxu0 0.0
      %314 = vmatprep.subr.mxu0 0.0
      %315 = vmatpush1.msra.mxu0 0.0
      %316 = vmatprep.subr.mxu0 0.0
      %317 = vmatpush1.msra.mxu0 0.0
      %318 = vmatprep.subr.mxu0 0.0
      %319 = vmatpush1.msra.mxu0 0.0
      %320 = vmatprep.subr.mxu0 0.0
      %321 = vmatpush1.msra.mxu0 0.0
      %322 = vmatprep.subr.mxu0 0.0
      %323 = vmatpush1.msra.mxu0 0.0
      %324 = vmatprep.subr.mxu0 0.0
      %325 = vmatpush1.msra.mxu0 0.0
      %326 = vmatprep.subr.mxu0 0.0
      %327 = vmatpush1.msra.mxu0 0.0
      %328 = vmatprep.subr.mxu0 0.0
      %329 = vmatpush1.msra.mxu0 0.0
      %330 = vmatprep.subr.mxu0 0.0
      %331 = vmatpush1.msra.mxu0 0.0
      %332 = vmatprep.subr.mxu0 0.0
      %333 = vmatpush1.msra.mxu0 0.0
      %334 = vmatprep.subr.mxu0 0.0
      %335 = vmatpush1.msra.mxu0 0.0
      %336 = vmatprep.subr.mxu0 0.0
      %337 = vmatpush1.msra.mxu0 0.0
      %338 = vmatprep.subr.mxu0 0.0
      %339 = vmatpush1.msra.mxu0 0.0
      %340 = vmatprep.subr.mxu0 0.0
      %341 = vmatpush1.msra.mxu0 0.0
      %342 = vmatprep.mubr.f32.mxu0 0.0
      %343 = vmatmul.mubr.f32.gmra.mrb[0].mxu0 %v254
      %v344 = vpop.f32.mrb[0].mxu0
      %v345 = vadd.f32 %v235, %v344
      %v346 = vpop.f32.mrb[0].mxu0
      %v347 = vadd.f32 %v235, %v346
      %348 = vmatprep.mubr.f32.mxu0 0.0
      %349 = vmatmul.mubr.f32.gmra.mrb[0].mxu0 %v257
      %v350 = vpop.f32.mrb[0].mxu0
      %v351 = vadd.f32 %v240, %v350
      %v352 = vpop.f32.mrb[0].mxu0
      %v353 = vadd.f32 %v240, %v352
      %354 = vmatprep.mubr.f32.mxu0 0.0
      %355 = vmatmul.mubr.f32.gmra.mrb[0].mxu0 %v260
      %v356 = vpop.f32.mrb[0].mxu0
      %v357 = vadd.f32 %v245, %v356
      %v358 = vpop.f32.mrb[0].mxu0
      %v359 = vadd.f32 %v245, %v358
      %360 = vmatprep.mubr.f32.mxu0 0.0
      %361 = vmatmul.mubr.f32.gmra.mrb[0].mxu0 %v263
      %v362 = vpop.f32.mrb[0].mxu0
      %v363 = vadd.f32 %v250, %v362
      %v364 = vpop.f32.mrb[0].mxu0
      %v365 = vadd.f32 %v250, %v364
      %366 = vdwg.mxu0
      %367 = vmatprep.subr.mxu0 %v219
      %368 = vmatpush1.msra.mxu0 %v218
      %369 = vmatprep.subr.mxu0 %v223
      %370 = vmatpush1.msra.mxu0 %v222
      %371 = vmatprep.subr.mxu0 %v276
      %372 = vmatpush1.msra.mxu0 %v273
      %373 = vmatprep.subr.mxu0 0.0
      %374 = vmatpush1.msra.mxu0 0.0
      %375 = vmatprep.subr.mxu0 0.0
      %376 = vmatpush1.msra.mxu0 0.0
      %377 = vmatprep.subr.mxu0 0.0
      %378 = vmatpush1.msra.mxu0 0.0
      %379 = vmatprep.subr.mxu0 0.0
      %380 = vmatpush1.msra.mxu0 0.0
      %381 = vmatprep.subr.mxu0 0.0
      %382 = vmatpush1.msra.mxu0 0.0
      %383 = vmatprep.subr.mxu0 0.0
      %384 = vmatpush1.msra.mxu0 0.0
      %385 = vmatprep.subr.mxu0 0.0
      %386 = vmatpush1.msra.mxu0 0.0
      %387 = vmatprep.subr.mxu0 0.0
      %388 = vmatpush1.msra.mxu0 0.0
      %389 = vmatprep.subr.mxu0 0.0
      %390 = vmatpush1.msra.mxu0 0.0
      %391 = vmatprep.subr.mxu0 0.0
      %392 = vmatpush1.msra.mxu0 0.0
      %393 = vmatprep.subr.mxu0 0.0
      %394 = vmatpush1.msra.mxu0 0.0
      %395 = vmatprep.subr.mxu0 0.0
      %396 = vmatpush1.msra.mxu0 0.0
      %397 = vmatprep.subr.mxu0 0.0
      %398 = vmatpush1.msra.mxu0 0.0
      %399 = vmatprep.subr.mxu0 0.0
      %400 = vmatpush1.msra.mxu0 0.0
      %401 = vmatprep.subr.mxu0 0.0
      %402 = vmatpush1.msra.mxu0 0.0
      %403 = vmatprep.subr.mxu0 0.0
      %404 = vmatpush1.msra.mxu0 0.0
      %405 = vmatprep.subr.mxu0 0.0
      %406 = vmatpush1.msra.mxu0 0.0
      %407 = vmatprep.subr.mxu0 0.0
      %408 = vmatpush1.msra.mxu0 0.0
      %409 = vmatprep.subr.mxu0 0.0
      %410 = vmatpush1.msra.mxu0 0.0
      %411 = vmatprep.subr.mxu0 0.0
      %412 = vmatpush1.msra.mxu0 0.0
      %413 = vmatprep.subr.mxu0 0.0
      %414 = vmatpush1.msra.mxu0 0.0
      %415 = vmatprep.subr.mxu0 0.0
      %416 = vmatpush1.msra.mxu0 0.0
      %417 = vmatprep.subr.mxu0 0.0
      %418 = vmatpush1.msra.mxu0 0.0
      %419 = vmatprep.subr.mxu0 0.0
      %420 = vmatpush1.msra.mxu0 0.0
      %421 = vmatprep.subr.mxu0 0.0
      %422 = vmatpush1.msra.mxu0 0.0
      %423 = vmatprep.subr.mxu0 0.0
      %424 = vmatpush1.msra.mxu0 0.0
      %425 = vmatprep.subr.mxu0 0.0
      %426 = vmatpush1.msra.mxu0 0.0
      %427 = vmatprep.subr.mxu0 0.0
      %428 = vmatpush1.msra.mxu0 0.0
      %429 = vmatprep.subr.mxu0 0.0
      %430 = vmatpush1.msra.mxu0 0.0
      %431 = vmatprep.mubr.f32.mxu0 0.0
      %432 = vmatmul.mubr.f32.gmra.mrb[0].mxu0 %v254
      %v433 = vpop.f32.mrb[0].mxu0
      %v434 = vadd.f32 %v235, %v433
      %v435 = vpop.f32.mrb[0].mxu0
      %v436 = vadd.f32 %v235, %v435
      %437 = vmatprep.mubr.f32.mxu0 0.0
      %438 = vmatmul.mubr.f32.gmra.mrb[0].mxu0 %v257
      %v439 = vpop.f32.mrb[0].mxu0
      %v440 = vadd.f32 %v240, %v439
      %v441 = vpop.f32.mrb[0].mxu0
      %v442 = vadd.f32 %v240, %v441
      %443 = vmatprep.mubr.f32.mxu0 0.0
      %444 = vmatmul.mubr.f32.gmra.mrb[0].mxu0 %v260
      %v445 = vpop.f32.mrb[0].mxu0
      %v446 = vadd.f32 %v245, %v445
      %v447 = vpop.f32.mrb[0].mxu0
      %v448 = vadd.f32 %v245, %v447
      %449 = vmatprep.mubr.f32.mxu0 0.0
      %450 = vmatmul.mubr.f32.gmra.mrb[0].mxu0 %v263
      %v451 = vpop.f32.mrb[0].mxu0
      %v452 = vadd.f32 %v250, %v451
      %v453 = vpop.f32.mrb[0].mxu0
      %v454 = vadd.f32 %v250, %v453
      %455 = vdwg.mxu0
      %v456 = vmul.f32 %v345, 0.5
      %v457 = vmul.f32 %v351, 0.5
      %v458 = vmul.f32 %v357, 0.5
      %v459 = vtanh.pop %v456
      %v460 = vtanh.pop %v457
      %v461 = vtanh.pop %v458
      %v462 = vmul.f32 %v459, 0.5
      %v463 = vadd.f32 %v462, 0.5
      %v464 = vmul.f32 %v460, 0.5
      %v465 = vadd.f32 %v464, 0.5
      %v466 = vmul.f32 %v461, 0.5
      %v467 = vadd.f32 %v466, 0.5
      %v468 = vtanh.pop %v363
      %v469 = vmul.f32 %v465, 0.0
      %v470 = vmul.f32 %v463, %v468
      %v471 = vadd.f32 %v469, %v470
      %v472 = vtanh.pop %v471
      %v473 = vmul.f32 %v467, %v472
      %474 = vst [vmem:[%s197] sm:$0xff] %v473
      %476 = vrot.lane.b32.xlu0 %v473, 17
      %v477 = vpop.permute.xlu0 %476
      %vm479 = vcmask 138240
      %v480 = vsel %vm479, 0.0, %v477
      %vm481 = vcmp.ge.s32.totalorder %v211, 1
      %v482 = vsel %vm481, %v480, 0.0
      %483 = vrot.lane.b32.xlu0 %v473, 16
      %v484 = vpop.permute.xlu0 %483
      %vm486 = vcmask 130048
      %v487 = vsel %vm486, 0.0, %v484
      %488 = vrot.lane.b32.xlu0 %v473, 15
      %v489 = vpop.permute.xlu0 %488
      %vm491 = vcmask 121856
      %v492 = vsel %vm491, 0.0, %v489
      %vm493 = vcmp.lt.s32.totalorder %v211, 15
      %v494 = vsel %vm493, %v492, 0.0
      %495 = vrot.lane.b32.xlu0 %v473, 1
      %v496 = vpop.permute.xlu0 %495
      %vm498 = vcmask 7168
      %v499 = vsel %vm498, 0.0, %v496
      %v500 = vsel %vm481, %v499, 0.0
      %501 = vrot.lane.b32.xlu0 %v473, 127
      %v502 = vpop.permute.xlu0 %501
      %vm504 = vcmask 1039360
      %v505 = vsel %vm504, %v502, 0.0
      %v506 = vsel %vm493, %v505, 0.0
      %507 = vrot.lane.b32.xlu0 %v473, 113
      %v508 = vpop.permute.xlu0 %507
      %vm510 = vcmask 924672
      %v511 = vsel %vm510, %v508, 0.0
      %v512 = vsel %vm481, %v511, 0.0
      %513 = vrot.lane.b32.xlu0 %v473, 112
      %v514 = vpop.permute.xlu0 %513
      %vm516 = vcmask 916480
      %v517 = vsel %vm516, %v514, 0.0
      %518 = vrot.lane.b32.xlu0 %v473, 111
      %v519 = vpop.permute.xlu0 %518
      %vm521 = vcmask 908288
      %v522 = vsel %vm521, %v519, 0.0
      %v523 = vsel %vm493, %v522, 0.0
      %v524 = vld [vmem:[%s2] sm:$0xff]
      %v525 = vld [vmem:[%s2 + $0x8] sm:$0xff]
      %v526 = vld [vmem:[%s2 + $0x10] sm:$0xff]
      %v527 = vld [vmem:[%s2 + $0x18] sm:$0xff]
      %vm528 = vcmask 588800
      %v530 = vsel %vm528, %v524, 0
      %v533 = vsel %vm528, %v525, 0
      %v536 = vsel %vm528, %v526, 0
      %v539 = vsel %vm528, %v527, 0
      %541 = vmatprep.subr.mxu0 0.0
      %542 = vmatpush1.msra.mxu0 %v482
      %543 = vmatprep.subr.mxu0 0.0
      %544 = vmatpush1.msra.mxu0 %v487
      %545 = vmatprep.subr.mxu0 0.0
      %546 = vmatpush1.msra.mxu0 %v494
      %547 = vmatprep.subr.mxu0 0.0
      %548 = vmatpush1.msra.mxu0 %v500
      %549 = vmatprep.subr.mxu0 0.0
      %550 = vmatpush1.msra.mxu0 %v473
      %551 = vmatprep.subr.mxu0 0.0
      %552 = vmatpush1.msra.mxu0 %v506
      %553 = vmatprep.subr.mxu0 0.0
      %554 = vmatpush1.msra.mxu0 %v512
      %555 = vmatprep.subr.mxu0 0.0
      %556 = vmatpush1.msra.mxu0 %v517
      %557 = vmatprep.subr.mxu0 0.0
      %558 = vmatpush1.msra.mxu0 %v523
      %559 = vmatprep.subr.mxu0 0.0
      %560 = vmatpush1.msra.mxu0 0.0
      %561 = vmatprep.subr.mxu0 0.0
      %562 = vmatpush1.msra.mxu0 0.0
      %563 = vmatprep.subr.mxu0 0.0
      %564 = vmatpush1.msra.mxu0 0.0
      %565 = vmatprep.subr.mxu0 0.0
      %566 = vmatpush1.msra.mxu0 0.0
      %567 = vmatprep.subr.mxu0 0.0
      %568 = vmatpush1.msra.mxu0 0.0
      %569 = vmatprep.subr.mxu0 0.0
      %570 = vmatpush1.msra.mxu0 0.0
      %571 = vmatprep.subr.mxu0 0.0
      %572 = vmatpush1.msra.mxu0 0.0
      %573 = vmatprep.subr.mxu0 0.0
      %574 = vmatpush1.msra.mxu0 0.0
      %575 = vmatprep.subr.mxu0 0.0
      %576 = vmatpush1.msra.mxu0 0.0
      %577 = vmatprep.subr.mxu0 0.0
      %578 = vmatpush1.msra.mxu0 0.0
      %579 = vmatprep.subr.mxu0 0.0
      %580 = vmatpush1.msra.mxu0 0.0
      %581 = vmatprep.subr.mxu0 0.0
      %582 = vmatpush1.msra.mxu0 0.0
      %583 = vmatprep.subr.mxu0 0.0
      %584 = vmatpush1.msra.mxu0 0.0
      %585 = vmatprep.subr.mxu0 0.0
      %586 = vmatpush1.msra.mxu0 0.0
      %587 = vmatprep.subr.mxu0 0.0
      %588 = vmatpush1.msra.mxu0 0.0
      %589 = vmatprep.subr.mxu0 0.0
      %590 = vmatpush1.msra.mxu0 0.0
      %591 = vmatprep.subr.mxu0 0.0
      %592 = vmatpush1.msra.mxu0 0.0
      %593 = vmatprep.subr.mxu0 0.0
      %594 = vmatpush1.msra.mxu0 0.0
      %595 = vmatprep.subr.mxu0 0.0
      %596 = vmatpush1.msra.mxu0 0.0
      %597 = vmatprep.subr.mxu0 0.0
      %598 = vmatpush1.msra.mxu0 0.0
      %599 = vmatprep.subr.mxu0 0.0
      %600 = vmatpush1.msra.mxu0 0.0
      %601 = vmatprep.subr.mxu0 0.0
      %602 = vmatpush1.msra.mxu0 0.0
      %603 = vmatprep.subr.mxu0 0.0
      %604 = vmatpush1.msra.mxu0 0.0
      %605 = vmatprep.mubr.f32.mxu0 0.0
      %606 = vmatmul.mubr.f32.gmra.mrb[0].mxu0 %v530
      %v607 = vpop.f32.mrb[0].mxu0
      %v608 = vadd.f32 0.0, %v607
      %v609 = vpop.f32.mrb[0].mxu0
      %610 = vmatprep.mubr.f32.mxu0 0.0
      %611 = vmatmul.mubr.f32.gmra.mrb[0].mxu0 %v533
      %v612 = vpop.f32.mrb[0].mxu0
      %v613 = vadd.f32 0.0, %v612
      %v614 = vpop.f32.mrb[0].mxu0
      %615 = vmatprep.mubr.f32.mxu0 0.0
      %616 = vmatmul.mubr.f32.gmra.mrb[0].mxu0 %v536
      %v617 = vpop.f32.mrb[0].mxu0
      %v618 = vadd.f32 0.0, %v617
      %v619 = vpop.f32.mrb[0].mxu0
      %620 = vmatprep.mubr.f32.mxu0 0.0
      %621 = vmatmul.mubr.f32.gmra.mrb[0].mxu0 %v539
      %v622 = vpop.f32.mrb[0].mxu0
      %v623 = vadd.f32 0.0, %v622
      %v624 = vpop.f32.mrb[0].mxu0
      %625 = vdwg.mxu0
      %v626 = vadd.f32 %v347, %v608
      %v627 = vadd.f32 %v353, %v613
      %v628 = vadd.f32 %v359, %v618
      %v629 = vadd.f32 %v365, %v623
      %v630 = vmul.f32 %v626, 0.5
      %v631 = vmul.f32 %v627, 0.5
      %v632 = vmul.f32 %v628, 0.5
      %v633 = vtanh.pop %v630
      %v634 = vtanh.pop %v631
      %v635 = vtanh.pop %v632
      %v636 = vmul.f32 %v633, 0.5
      %v637 = vadd.f32 %v636, 0.5
      %v638 = vmul.f32 %v634, 0.5
      %v639 = vadd.f32 %v638, 0.5
      %v640 = vmul.f32 %v635, 0.5
      %v641 = vadd.f32 %v640, 0.5
      %v642 = vtanh.pop %v629
      %v643 = vmul.f32 %v639, %v471
      %v644 = vmul.f32 %v637, %v642
      %v645 = vadd.f32 %v643, %v644
      %v646 = vtanh.pop %v645
      %v647 = vmul.f32 %v641, %v646
      %s648 = scalar_lea.vmem %s197, 8
      %649 = vst [vmem:[%s648] sm:$0xff] %v647
      %651 = vrot.lane.b32.xlu0 %v647, 17
      %v652 = vpop.permute.xlu0 %651
      %v654 = vsel %vm479, 0.0, %v652
      %v655 = vsel %vm481, %v654, 0.0
      %656 = vrot.lane.b32.xlu0 %v647, 16
      %v657 = vpop.permute.xlu0 %656
      %v659 = vsel %vm486, 0.0, %v657
      %660 = vrot.lane.b32.xlu0 %v647, 15
      %v661 = vpop.permute.xlu0 %660
      %v663 = vsel %vm491, 0.0, %v661
      %v664 = vsel %vm493, %v663, 0.0
      %665 = vrot.lane.b32.xlu0 %v647, 1
      %v666 = vpop.permute.xlu0 %665
      %v668 = vsel %vm498, 0.0, %v666
      %v669 = vsel %vm481, %v668, 0.0
      %670 = vrot.lane.b32.xlu0 %v647, 127
      %v671 = vpop.permute.xlu0 %670
      %v673 = vsel %vm504, %v671, 0.0
      %v674 = vsel %vm493, %v673, 0.0
      %675 = vrot.lane.b32.xlu0 %v647, 113
      %v676 = vpop.permute.xlu0 %675
      %v678 = vsel %vm510, %v676, 0.0
      %v679 = vsel %vm481, %v678, 0.0
      %680 = vrot.lane.b32.xlu0 %v647, 112
      %v681 = vpop.permute.xlu0 %680
      %v683 = vsel %vm516, %v681, 0.0
      %684 = vrot.lane.b32.xlu0 %v647, 111
      %v685 = vpop.permute.xlu0 %684
      %v687 = vsel %vm521, %v685, 0.0
      %v688 = vsel %vm493, %v687, 0.0
      %v689 = vld [vmem:[%s2] sm:$0xff]
      %v690 = vld [vmem:[%s2 + $0x8] sm:$0xff]
      %v691 = vld [vmem:[%s2 + $0x10] sm:$0xff]
      %v692 = vld [vmem:[%s2 + $0x18] sm:$0xff]
      %v694 = vsel %vm528, %v689, 0
      %v697 = vsel %vm528, %v690, 0
      %v700 = vsel %vm528, %v691, 0
      %v703 = vsel %vm528, %v692, 0
      %705 = vmatprep.subr.mxu0 0.0
      %706 = vmatpush1.msra.mxu0 %v655
      %707 = vmatprep.subr.mxu0 0.0
      %708 = vmatpush1.msra.mxu0 %v659
      %709 = vmatprep.subr.mxu0 0.0
      %710 = vmatpush1.msra.mxu0 %v664
      %711 = vmatprep.subr.mxu0 0.0
      %712 = vmatpush1.msra.mxu0 %v669
      %713 = vmatprep.subr.mxu0 0.0
      %714 = vmatpush1.msra.mxu0 %v647
      %715 = vmatprep.subr.mxu0 0.0
      %716 = vmatpush1.msra.mxu0 %v674
      %717 = vmatprep.subr.mxu0 0.0
      %718 = vmatpush1.msra.mxu0 %v679
      %719 = vmatprep.subr.mxu0 0.0
      %720 = vmatpush1.msra.mxu0 %v683
      %721 = vmatprep.subr.mxu0 0.0
      %722 = vmatpush1.msra.mxu0 %v688
      %723 = vmatprep.subr.mxu0 0.0
      %724 = vmatpush1.msra.mxu0 0.0
      %725 = vmatprep.subr.mxu0 0.0
      %726 = vmatpush1.msra.mxu0 0.0
      %727 = vmatprep.subr.mxu0 0.0
      %728 = vmatpush1.msra.mxu0 0.0
      %729 = vmatprep.subr.mxu0 0.0
      %730 = vmatpush1.msra.mxu0 0.0
      %731 = vmatprep.subr.mxu0 0.0
      %732 = vmatpush1.msra.mxu0 0.0
      %733 = vmatprep.subr.mxu0 0.0
      %734 = vmatpush1.msra.mxu0 0.0
      %735 = vmatprep.subr.mxu0 0.0
      %736 = vmatpush1.msra.mxu0 0.0
      %737 = vmatprep.subr.mxu0 0.0
      %738 = vmatpush1.msra.mxu0 0.0
      %739 = vmatprep.subr.mxu0 0.0
      %740 = vmatpush1.msra.mxu0 0.0
      %741 = vmatprep.subr.mxu0 0.0
      %742 = vmatpush1.msra.mxu0 0.0
      %743 = vmatprep.subr.mxu0 0.0
      %744 = vmatpush1.msra.mxu0 0.0
      %745 = vmatprep.subr.mxu0 0.0
      %746 = vmatpush1.msra.mxu0 0.0
      %747 = vmatprep.subr.mxu0 0.0
      %748 = vmatpush1.msra.mxu0 0.0
      %749 = vmatprep.subr.mxu0 0.0
      %750 = vmatpush1.msra.mxu0 0.0
      %751 = vmatprep.subr.mxu0 0.0
      %752 = vmatpush1.msra.mxu0 0.0
      %753 = vmatprep.subr.mxu0 0.0
      %754 = vmatpush1.msra.mxu0 0.0
      %755 = vmatprep.subr.mxu0 0.0
      %756 = vmatpush1.msra.mxu0 0.0
      %757 = vmatprep.subr.mxu0 0.0
      %758 = vmatpush1.msra.mxu0 0.0
      %759 = vmatprep.subr.mxu0 0.0
      %760 = vmatpush1.msra.mxu0 0.0
      %761 = vmatprep.subr.mxu0 0.0
      %762 = vmatpush1.msra.mxu0 0.0
      %763 = vmatprep.subr.mxu0 0.0
      %764 = vmatpush1.msra.mxu0 0.0
      %765 = vmatprep.subr.mxu0 0.0
      %766 = vmatpush1.msra.mxu0 0.0
      %767 = vmatprep.subr.mxu0 0.0
      %768 = vmatpush1.msra.mxu0 0.0
      %769 = vmatprep.mubr.f32.mxu0 0.0
      %770 = vmatmul.mubr.f32.gmra.mrb[0].mxu0 %v694
      %v771 = vpop.f32.mrb[0].mxu0
      %v772 = vadd.f32 0.0, %v771
      %v773 = vpop.f32.mrb[0].mxu0
      %774 = vmatprep.mubr.f32.mxu0 0.0
      %775 = vmatmul.mubr.f32.gmra.mrb[0].mxu0 %v697
      %v776 = vpop.f32.mrb[0].mxu0
      %v777 = vadd.f32 0.0, %v776
      %v778 = vpop.f32.mrb[0].mxu0
      %779 = vmatprep.mubr.f32.mxu0 0.0
      %780 = vmatmul.mubr.f32.gmra.mrb[0].mxu0 %v700
      %v781 = vpop.f32.mrb[0].mxu0
      %v782 = vadd.f32 0.0, %v781
      %v783 = vpop.f32.mrb[0].mxu0
      %784 = vmatprep.mubr.f32.mxu0 0.0
      %785 = vmatmul.mubr.f32.gmra.mrb[0].mxu0 %v703
      %v786 = vpop.f32.mrb[0].mxu0
      %v787 = vadd.f32 0.0, %v786
      %v788 = vpop.f32.mrb[0].mxu0
      %789 = vdwg.mxu0
      %v790 = vadd.f32 %v434, %v772
      %v791 = vadd.f32 %v440, %v777
      %v792 = vadd.f32 %v446, %v782
      %v793 = vadd.f32 %v452, %v787
      %v794 = vmul.f32 %v790, 0.5
      %v795 = vmul.f32 %v791, 0.5
      %v796 = vmul.f32 %v792, 0.5
      %v797 = vtanh.pop %v794
      %v798 = vtanh.pop %v795
      %v799 = vtanh.pop %v796
      %v800 = vmul.f32 %v797, 0.5
      %v801 = vadd.f32 %v800, 0.5
      %v802 = vmul.f32 %v798, 0.5
      %v803 = vadd.f32 %v802, 0.5
      %v804 = vmul.f32 %v799, 0.5
      %v805 = vadd.f32 %v804, 0.5
      %v806 = vtanh.pop %v793
      %v807 = vmul.f32 %v803, %v645
      %v808 = vmul.f32 %v801, %v806
      %v809 = vadd.f32 %v807, %v808
      %v810 = vtanh.pop %v809
      %v811 = vmul.f32 %v805, %v810
      %s812 = scalar_lea.vmem %s197, 16
      %813 = vst [vmem:[%s812] sm:$0xff] %v811
      %815 = vrot.lane.b32.xlu0 %v811, 17
      %v816 = vpop.permute.xlu0 %815
      %v818 = vsel %vm479, 0.0, %v816
      %v819 = vsel %vm481, %v818, 0.0
      %820 = vrot.lane.b32.xlu0 %v811, 16
      %v821 = vpop.permute.xlu0 %820
      %v823 = vsel %vm486, 0.0, %v821
      %824 = vrot.lane.b32.xlu0 %v811, 15
      %v825 = vpop.permute.xlu0 %824
      %v827 = vsel %vm491, 0.0, %v825
      %v828 = vsel %vm493, %v827, 0.0
      %829 = vrot.lane.b32.xlu0 %v811, 1
      %v830 = vpop.permute.xlu0 %829
      %v832 = vsel %vm498, 0.0, %v830
      %v833 = vsel %vm481, %v832, 0.0
      %834 = vrot.lane.b32.xlu0 %v811, 127
      %v835 = vpop.permute.xlu0 %834
      %v837 = vsel %vm504, %v835, 0.0
      %v838 = vsel %vm493, %v837, 0.0
      %839 = vrot.lane.b32.xlu0 %v811, 113
      %v840 = vpop.permute.xlu0 %839
      %v842 = vsel %vm510, %v840, 0.0
      %v843 = vsel %vm481, %v842, 0.0
      %844 = vrot.lane.b32.xlu0 %v811, 112
      %v845 = vpop.permute.xlu0 %844
      %v847 = vsel %vm516, %v845, 0.0
      %848 = vrot.lane.b32.xlu0 %v811, 111
      %v849 = vpop.permute.xlu0 %848
      %v851 = vsel %vm521, %v849, 0.0
      %v852 = vsel %vm493, %v851, 0.0
      %v853 = vld [vmem:[%s2] sm:$0xff]
      %v854 = vld [vmem:[%s2 + $0x8] sm:$0xff]
      %v855 = vld [vmem:[%s2 + $0x10] sm:$0xff]
      %v856 = vld [vmem:[%s2 + $0x18] sm:$0xff]
      %v858 = vsel %vm528, %v853, 0
      %v861 = vsel %vm528, %v854, 0
      %v864 = vsel %vm528, %v855, 0
      %v867 = vsel %vm528, %v856, 0
      %869 = vmatprep.subr.mxu0 0.0
      %870 = vmatpush1.msra.mxu0 %v819
      %871 = vmatprep.subr.mxu0 0.0
      %872 = vmatpush1.msra.mxu0 %v823
      %873 = vmatprep.subr.mxu0 0.0
      %874 = vmatpush1.msra.mxu0 %v828
      %875 = vmatprep.subr.mxu0 0.0
      %876 = vmatpush1.msra.mxu0 %v833
      %877 = vmatprep.subr.mxu0 0.0
      %878 = vmatpush1.msra.mxu0 %v811
      %879 = vmatprep.subr.mxu0 0.0
      %880 = vmatpush1.msra.mxu0 %v838
      %881 = vmatprep.subr.mxu0 0.0
      %882 = vmatpush1.msra.mxu0 %v843
      %883 = vmatprep.subr.mxu0 0.0
      %884 = vmatpush1.msra.mxu0 %v847
      %885 = vmatprep.subr.mxu0 0.0
      %886 = vmatpush1.msra.mxu0 %v852
      %887 = vmatprep.subr.mxu0 0.0
      %888 = vmatpush1.msra.mxu0 0.0
      %889 = vmatprep.subr.mxu0 0.0
      %890 = vmatpush1.msra.mxu0 0.0
      %891 = vmatprep.subr.mxu0 0.0
      %892 = vmatpush1.msra.mxu0 0.0
      %893 = vmatprep.subr.mxu0 0.0
      %894 = vmatpush1.msra.mxu0 0.0
      %895 = vmatprep.subr.mxu0 0.0
      %896 = vmatpush1.msra.mxu0 0.0
      %897 = vmatprep.subr.mxu0 0.0
      %898 = vmatpush1.msra.mxu0 0.0
      %899 = vmatprep.subr.mxu0 0.0
      %900 = vmatpush1.msra.mxu0 0.0
      %901 = vmatprep.subr.mxu0 0.0
      %902 = vmatpush1.msra.mxu0 0.0
      %903 = vmatprep.subr.mxu0 0.0
      %904 = vmatpush1.msra.mxu0 0.0
      %905 = vmatprep.subr.mxu0 0.0
      %906 = vmatpush1.msra.mxu0 0.0
      %907 = vmatprep.subr.mxu0 0.0
      %908 = vmatpush1.msra.mxu0 0.0
      %909 = vmatprep.subr.mxu0 0.0
      %910 = vmatpush1.msra.mxu0 0.0
      %911 = vmatprep.subr.mxu0 0.0
      %912 = vmatpush1.msra.mxu0 0.0
      %913 = vmatprep.subr.mxu0 0.0
      %914 = vmatpush1.msra.mxu0 0.0
      %915 = vmatprep.subr.mxu0 0.0
      %916 = vmatpush1.msra.mxu0 0.0
      %917 = vmatprep.subr.mxu0 0.0
      %918 = vmatpush1.msra.mxu0 0.0
      %919 = vmatprep.subr.mxu0 0.0
      %920 = vmatpush1.msra.mxu0 0.0
      %921 = vmatprep.subr.mxu0 0.0
      %922 = vmatpush1.msra.mxu0 0.0
      %923 = vmatprep.subr.mxu0 0.0
      %924 = vmatpush1.msra.mxu0 0.0
      %925 = vmatprep.subr.mxu0 0.0
      %926 = vmatpush1.msra.mxu0 0.0
      %927 = vmatprep.subr.mxu0 0.0
      %928 = vmatpush1.msra.mxu0 0.0
      %929 = vmatprep.subr.mxu0 0.0
      %930 = vmatpush1.msra.mxu0 0.0
      %931 = vmatprep.subr.mxu0 0.0
      %932 = vmatpush1.msra.mxu0 0.0
      %933 = vmatprep.mubr.f32.mxu0 0.0
      %934 = vmatmul.mubr.f32.gmra.mrb[0].mxu0 %v858
      %v935 = vpop.f32.mrb[0].mxu0
      %v936 = vadd.f32 0.0, %v935
      %v937 = vpop.f32.mrb[0].mxu0
      %938 = vmatprep.mubr.f32.mxu0 0.0
      %939 = vmatmul.mubr.f32.gmra.mrb[0].mxu0 %v861
      %v940 = vpop.f32.mrb[0].mxu0
      %v941 = vadd.f32 0.0, %v940
      %v942 = vpop.f32.mrb[0].mxu0
      %943 = vmatprep.mubr.f32.mxu0 0.0
      %944 = vmatmul.mubr.f32.gmra.mrb[0].mxu0 %v864
      %v945 = vpop.f32.mrb[0].mxu0
      %v946 = vadd.f32 0.0, %v945
      %v947 = vpop.f32.mrb[0].mxu0
      %948 = vmatprep.mubr.f32.mxu0 0.0
      %949 = vmatmul.mubr.f32.gmra.mrb[0].mxu0 %v867
      %v950 = vpop.f32.mrb[0].mxu0
      %v951 = vadd.f32 0.0, %v950
      %v952 = vpop.f32.mrb[0].mxu0
      %953 = vdwg.mxu0
      %v954 = vadd.f32 %v436, %v936
      %v955 = vadd.f32 %v442, %v941
      %v956 = vadd.f32 %v448, %v946
      %v957 = vadd.f32 %v454, %v951
      %v958 = vmul.f32 %v954, 0.5
      %v959 = vmul.f32 %v955, 0.5
      %v960 = vmul.f32 %v956, 0.5
      %v961 = vtanh.pop %v958
      %v962 = vtanh.pop %v959
      %v963 = vtanh.pop %v960
      %v964 = vmul.f32 %v961, 0.5
      %v965 = vadd.f32 %v964, 0.5
      %v966 = vmul.f32 %v962, 0.5
      %v967 = vadd.f32 %v966, 0.5
      %v968 = vmul.f32 %v963, 0.5
      %v969 = vadd.f32 %v968, 0.5
      %v970 = vtanh.pop %v957
      %v971 = vmul.f32 %v967, %v809
      %v972 = vmul.f32 %v965, %v970
      %v973 = vadd.f32 %v971, %v972
      %v974 = vtanh.pop %v973
      %v975 = vmul.f32 %v969, %v974
      %s976 = scalar_lea.vmem %s197, 24
      %977 = vst [vmem:[%s976] sm:$0xff] %v975
      %p978 = scmp.lt.s32.totalorder %s15, 1
      %s979 = scalar_select %p978, %s15, 1
      %s980 = smul.addr %s979, 4
      %s981 = smul.addr %s980, 8
      %s982 = scalar_lea.vmem %s4, %s981
      // Predicated region
      $region37: #{net_forward.3} parent=35 // pred_check
        %p983 = pneg %p122
      $region38: #{net_forward.3} parent=35 // pred_check_branch
        %985 = sbr.rel (%p983) target = $region40
      $region39: #{net_forward.3} parent=35 // pred_region
        _
      $region40: #{net_forward.3} parent=35 // pred_fallthru
        _
    $region36: #{net_forward.3} parent=5 // pred_fallthru
      _
    %p986 = scmp.le.s32.totalorder 2, %s10
    // Predicated region
    $region41: #{net_forward.3} parent=5 // pred_check
      %p987 = pneg %p986
    $region42: #{net_forward.3} parent=5 // pred_check_branch
      %989 = sbr.rel (%p987) target = $region44
    $region43: #{net_forward.3} parent=5 // pred_region
      %s990 = ssub.s32 %s10, 2
      // Predicated region
      $region45: #{net_forward.3} parent=43 // pred_check
        %p991 = pneg %p128
      $region46: #{net_forward.3} parent=43 // pred_check_branch
        %993 = sbr.rel (%p991) target = $region48
      $region47: #{net_forward.3} parent=43 // pred_region
        %p994 = scmp.lt.s32.totalorder %s16, 1
        %s995 = scalar_select %p994, %s16, 1
        %s996 = smul.addr %s995, 4
        %s997 = smul.addr %s996, 8
        %s998 = scalar_lea.vmem %s4, %s997
      $region48: #{net_forward.3} parent=43 // pred_fallthru
        _
    $region44: #{net_forward.3} parent=5 // pred_fallthru
      _
  $region6: #{net_forward.3} parent=0 // loop_footer
    %s14 = sadd.s32 1, %s10
  $region7: #{net_forward.3} parent=0 // loop_footer_branch
    %9 = sbr.rel target = $region3
  $region8: #{net_forward.3} parent=0 // loop_exit
    _

// kernel: net_forward.4
$region0: #{net_forward.4}
  #allocation0 [shape = 'u32[]', space=smem, size = 0x4, offset = 0x4, fixed_abs, tag = 'smem constant byte address 0x4 - core index']
  #allocation1 [shape = 'u32[144,128]{1,0:T(1,128)}', space=vmem, size = 0x12000, scoped, tag = 'internal scratch']
  %s0 = inlined_call_operand.vmem [shape: f32[2,72,64], index: 0, kind: input, shape index: {}]
  %s1 = inlined_call_operand.vmem [shape: f32[32,72], index: 1, kind: input, shape index: {}]
  %s2 = inlined_call_operand.vmem [shape: f32[32,72], index: 2, kind: input, shape index: {}]
  %s3 = inlined_call_operand.vmem [shape: f32[32,1], index: 3, kind: input, shape index: {}]
  %s4 = inlined_call_operand.vmem [shape: f32[2,2,8,32], index: 4, kind: output, shape index: {}]
  %s5 = sld [smem:[#allocation0]]
  $region49: #{net_forward.4} parent=0
    _
  %s7 = ssub.s32 1, %s5
  %s8 = scalar_select 0, %s7, %s5
  loop: start=0, step=1, limit=4
  $region2: #{net_forward.4} parent=0 // loop_pre_header
    _
  $region3: #{net_forward.4} parent=0 // loop_header
    %s10 = sphi 0, %s14
    %p11 = scmp.ge.s32.totalorder %s10, 4
    %s20 = sphi 0, %s22
    %s23 = sphi 0, %s20
    %s24 = sphi 0, %s23
    %s40 = sphi 0, %s24
    %s44 = sphi 0, %s44
    %s46 = sphi 0, %s44
    %s47 = sphi 0, %s46
    %s61 = sphi 0, %s47
    %s65 = sphi 0, %s65
    %s67 = sphi 0, %s65
    %s68 = sphi 0, %s67
    %s82 = sphi 0, %s68
    %s86 = sphi 0, %s86
    %s88 = sphi 0, %s86
    %s89 = sphi 0, %s88
    %s103 = sphi 0, %s89
    %s109 = sphi 0, %s111
    %s112 = sphi 0, %s109
    %s113 = sphi 0, %s112
    %s129 = sphi 0, %s113
  $region4: #{net_forward.4} parent=0 // loop_header_branch
    %13 = sbr.rel (%p11) target = $region8
  $region5: #{net_forward.4} parent=0 // loop_body
    %s15 = ssub.s32 %s10, 1
    %s16 = ssub.s32 %s10, 2
    %s17 = sadd.s32 %s10, 1
    %s18 = ssub.s32 %s10, %s17
    %p19 = scmp.eq.s32.totalorder %s18, 0
    %s21 = sadd.s32 %s20, 1
    %s22 = scalar_select %p19, %s20, %s21
    %p25 = pneg %p19
    %p26 = scmp.eq.s32.totalorder %s10, 1
    %p27 = por %p25, %p26
    %p28 = scmp.ne.s32.totalorder %s20, %s23
    %p29 = scmp.eq.s32.totalorder %s10, 0
    %p30 = por %p28, %p29
    %p31 = scmp.ne.s32.totalorder %s20, %s23
    %p32 = scmp.eq.s32.totalorder %s15, 1
    %p33 = por %p31, %p32
    %p34 = scmp.ne.s32.totalorder %s23, %s24
    %p35 = scmp.eq.s32.totalorder %s15, 0
    %p36 = por %p34, %p35
    %p37 = scmp.ne.s32.totalorder %s23, %s24
    %p38 = scmp.eq.s32.totalorder %s16, 1
    %p39 = por %p37, %p38
    %p41 = scmp.ne.s32.totalorder %s24, %s40
    %p42 = scmp.eq.s32.totalorder %s16, 0
    %p43 = por %p41, %p42
    %s45 = sadd.s32 %s44, 1
    %p48 = scmp.eq.s32.totalorder %s10, 1
    %p49 = scmp.ne.s32.totalorder %s44, %s46
    %p50 = scmp.eq.s32.totalorder %s10, 0
    %p51 = por %p49, %p50
    %p52 = scmp.ne.s32.totalorder %s44, %s46
    %p53 = scmp.eq.s32.totalorder %s15, 1
    %p54 = por %p52, %p53
    %p55 = scmp.ne.s32.totalorder %s46, %s47
    %p56 = scmp.eq.s32.totalorder %s15, 0
    %p57 = por %p55, %p56
    %p58 = scmp.ne.s32.totalorder %s46, %s47
    %p59 = scmp.eq.s32.totalorder %s16, 1
    %p60 = por %p58, %p59
    %p62 = scmp.ne.s32.totalorder %s47, %s61
    %p63 = scmp.eq.s32.totalorder %s16, 0
    %p64 = por %p62, %p63
    %s66 = sadd.s32 %s65, 1
    %p69 = scmp.eq.s32.totalorder %s10, 1
    %p70 = scmp.ne.s32.totalorder %s65, %s67
    %p71 = scmp.eq.s32.totalorder %s10, 0
    %p72 = por %p70, %p71
    %p73 = scmp.ne.s32.totalorder %s65, %s67
    %p74 = scmp.eq.s32.totalorder %s15, 1
    %p75 = por %p73, %p74
    %p76 = scmp.ne.s32.totalorder %s67, %s68
    %p77 = scmp.eq.s32.totalorder %s15, 0
    %p78 = por %p76, %p77
    %p79 = scmp.ne.s32.totalorder %s67, %s68
    %p80 = scmp.eq.s32.totalorder %s16, 1
    %p81 = por %p79, %p80
    %p83 = scmp.ne.s32.totalorder %s68, %s82
    %p84 = scmp.eq.s32.totalorder %s16, 0
    %p85 = por %p83, %p84
    %s87 = sadd.s32 %s86, 1
    %p90 = scmp.eq.s32.totalorder %s10, 1
    %p91 = scmp.ne.s32.totalorder %s86, %s88
    %p92 = scmp.eq.s32.totalorder %s10, 0
    %p93 = por %p91, %p92
    %p94 = scmp.ne.s32.totalorder %s86, %s88
    %p95 = scmp.eq.s32.totalorder %s15, 1
    %p96 = por %p94, %p95
    %p97 = scmp.ne.s32.totalorder %s88, %s89
    %p98 = scmp.eq.s32.totalorder %s15, 0
    %p99 = por %p97, %p98
    %p100 = scmp.ne.s32.totalorder %s88, %s89
    %p101 = scmp.eq.s32.totalorder %s16, 1
    %p102 = por %p100, %p101
    %p104 = scmp.ne.s32.totalorder %s89, %s103
    %p105 = scmp.eq.s32.totalorder %s16, 0
    %p106 = por %p104, %p105
    %s107 = ssub.s32 %s10, %s17
    %p108 = scmp.eq.s32.totalorder %s107, 0
    %s110 = sadd.s32 %s109, 1
    %s111 = scalar_select %p108, %s109, %s110
    %p114 = pneg %p108
    %p115 = scmp.eq.s32.totalorder %s10, 1
    %p116 = por %p114, %p115
    %p117 = scmp.ne.s32.totalorder %s109, %s112
    %p118 = scmp.eq.s32.totalorder %s10, 0
    %p119 = por %p117, %p118
    %p120 = scmp.ne.s32.totalorder %s109, %s112
    %p121 = scmp.eq.s32.totalorder %s15, 1
    %p122 = por %p120, %p121
    %p123 = scmp.ne.s32.totalorder %s112, %s113
    %p124 = scmp.eq.s32.totalorder %s15, 0
    %p125 = por %p123, %p124
    %p126 = scmp.ne.s32.totalorder %s112, %s113
    %p127 = scmp.eq.s32.totalorder %s16, 1
    %p128 = por %p126, %p127
    %p130 = scmp.ne.s32.totalorder %s113, %s129
    %p131 = scmp.eq.s32.totalorder %s16, 0
    %p132 = por %p130, %p131
    %p133 = scmp.le.s32.totalorder 1, %s10
    %p134 = scmp.lt.s32.totalorder %s10, 3
    %p135 = pnand %p133, %p134
    %p136 = pneg %p135
    // Predicated region
    $region9: #{net_forward.4} parent=5 // pred_check
      _
    $region10: #{net_forward.4} parent=5 // pred_check_branch
      %138 = sbr.rel (%p135) target = $region12
    $region11: #{net_forward.4} parent=5 // pred_region
      %s139 = ssub.s32 %s10, 1
      // Predicated region
      $region13: #{net_forward.4} parent=11 // pred_check
        %p140 = pneg %p57
      $region14: #{net_forward.4} parent=11 // pred_check_branch
        %142 = sbr.rel (%p140) target = $region16
      $region15: #{net_forward.4} parent=11 // pred_region
        _
      $region16: #{net_forward.4} parent=11 // pred_fallthru
        _
      // Predicated region
      $region17: #{net_forward.4} parent=11 // pred_check
        %p143 = pneg %p78
      $region18: #{net_forward.4} parent=11 // pred_check_branch
        %145 = sbr.rel (%p143) target = $region20
      $region19: #{net_forward.4} parent=11 // pred_region
        _
      $region20: #{net_forward.4} parent=11 // pred_fallthru
        _
      // Predicated region
      $region21: #{net_forward.4} parent=11 // pred_check
        %p146 = pneg %p99
      $region22: #{net_forward.4} parent=11 // pred_check_branch
        %148 = sbr.rel (%p146) target = $region24
      $region23: #{net_forward.4} parent=11 // pred_region
        _
      $region24: #{net_forward.4} parent=11 // pred_fallthru
        _
    $region12: #{net_forward.4} parent=5 // pred_fallthru
      _
    %p149 = scmp.lt.s32.totalorder %s10, 2
    // Predicated region
    $region25: #{net_forward.4} parent=5 // pred_check
      %p150 = pneg %p149
    $region26: #{net_forward.4} parent=5 // pred_check_branch
      %152 = sbr.rel (%p150) target = $region28
    $region27: #{net_forward.4} parent=5 // pred_region
      // Predicated region
      $region29: #{net_forward.4} parent=27 // pred_check
        %p153 = pneg %p30
      $region30: #{net_forward.4} parent=27 // pred_check_branch
        %155 = sbr.rel (%p153) target = $region32
      $region31: #{net_forward.4} parent=27 // pred_region
        %p156 = scmp.lt.s32.totalorder %s10, 1
        %s157 = scalar_select %p156, %s10, 1
        %s158 = smul.addr %s157, 9
        %s159 = smul.addr %s158, 8
        %s160 = scalar_lea.vmem %s0, %s159
      $region32: #{net_forward.4} parent=27 // pred_fallthru
        _
    $region28: #{net_forward.4} parent=5 // pred_fallthru
      _
    %p161 = scmp.le.s32.totalorder 1, %s10
    %p162 = scmp.lt.s32.totalorder %s10, 3
    %p163 = pnand %p161, %p162
    %p164 = pneg %p163
    // Predicated region
    $region33: #{net_forward.4} parent=5 // pred_check
      _
    $region34: #{net_forward.4} parent=5 // pred_check_branch
      %166 = sbr.rel (%p163) target = $region36
    $region35: #{net_forward.4} parent=5 // pred_region
      %s167 = ssub.s32 %s10, 1
      %p168 = scmp.lt.s32.totalorder %s15, 1
      %s169 = scalar_select %p168, %s15, 1
      %s170 = smul.addr %s169, 9
      %s171 = smul.addr %s170, 8
      %s172 = scalar_lea.vmem %s0, %s171
      %p173 = pneg %p36
      %p174 = pneg %p33
      %p175 = pneg %p57
      %p176 = pneg %p54
      %p177 = pneg %p78
      %p178 = pneg %p75
      %p179 = pneg %p99
      %p180 = pneg %p96
      %p181 = pneg %p125
      %p182 = pneg %p122
      %p183 = scmp.lt.s32.totalorder %s15, 1
      %s184 = scalar_select %p183, %s15, 1
      %s185 = smul.addr %s184, 2
      %s186 = smul.addr %s185, 8
      %s187 = scalar_lea.vmem %s4, %s186
      %p188 = scmp.lt.s32.totalorder %s15, 1
      %s189 = scalar_select %p188, %s15, 1
      %s190 = smul.addr %s189, 9
      %s191 = smul.addr %s190, 8
      %s192 = scalar_lea.vmem %s0, %s191
      %p193 = scmp.lt.s32.totalorder %s15, 1
      %s194 = scalar_select %p193, %s15, 1
      %s195 = smul.addr %s194, 2
      %s196 = smul.addr %s195, 8
      %s197 = scalar_lea.vmem %s4, %s196
      %v198 = vlaneseq
      %v199 = vand.u32 %v198, 127
      %vm200 = vcmp.lt.s32.totalorder %v199, 0
      %v201 = vsub.s32 0, %v199
      %v202 = vsel %vm200, %v201, %v199
      %v203 = vshrl.u32 %v202, 3
      %v204 = vand.u32 %v202, 7
      %v205 = vsub.s32 0, %v204
      %v206 = vsel %vm200, %v205, %v204
      %vm207 = vcmp.ne.s32.totalorder %v206, 0
      %vm208 = vcmp.lt.s32.totalorder %v206, 0
      %vm209 = vmand %vm208, %vm207
      %v210 = vadd.s32 %v206, 8
      %v211 = vsel %vm209, %v210, %v206
      %v212 = vld [vmem:[%s1] sm:$0xff]
      %v213 = vld [vmem:[%s1 + $0x8] sm:$0xff]
      %v214 = vld [vmem:[%s1 + $0x10] sm:$0xff]
      %v215 = vld [vmem:[%s1 + $0x18] sm:$0xff]
      %v216 = vld [vmem:[%s192] sm:$0xff]
      %v217 = vld [vmem:[%s192 + $0x8] sm:$0xff]
      %v218 = vld [vmem:[%s192 + $0x10] sm:$0xff]
      %v219 = vld [vmem:[%s192 + $0x18] sm:$0xff]
      %v220 = vld [vmem:[%s192 + $0x20] sm:$0xff]
      %v221 = vld [vmem:[%s192 + $0x28] sm:$0xff]
      %v222 = vld [vmem:[%s192 + $0x30] sm:$0xff]
      %v223 = vld [vmem:[%s192 + $0x38] sm:$0xff]
      %v224 = vld [vmem:[%s192 + $0x40] sm:$0xff]
      %v225 = vld [vmem:[%s3] sm:$0xff]
      %v226 = vld [vmem:[%s3 + $0x8] sm:$0xff]
      %v227 = vld [vmem:[%s3 + $0x10] sm:$0xff]
      %v228 = vld [vmem:[%s3 + $0x18] sm:$0xff]
      %230 = vset.pattern.permute.xlu0 0
      %231 = vperm.xlu0 %230, %v225
      %v232 = vpop.permute.xlu0 %231
      %235 = vset.pattern.permute.xlu0 0
      %236 = vperm.xlu0 %235, %v226
      %v237 = vpop.permute.xlu0 %236
      %240 = vset.pattern.permute.xlu0 0
      %241 = vperm.xlu0 %240, %v227
      %v242 = vpop.permute.xlu0 %241
      %245 = vset.pattern.permute.xlu0 0
      %246 = vperm.xlu0 %245, %v228
      %v247 = vpop.permute.xlu0 %246
      %vm249 = vcmask 588800
      %v251 = vsel %vm249, %v212, 0
      %v254 = vsel %vm249, %v213, 0
      %v257 = vsel %vm249, %v214, 0
      %v260 = vsel %vm249, %v215, 0
      %262 = vmatprep.subr.mxu0 0.0
      %263 = vmatpush1.msra.mxu0 %v216
      %264 = vmatprep.subr.mxu0 0.0
      %265 = vmatpush1.msra.mxu0 %v217
      %266 = vmatprep.subr.mxu0 0.0
      %267 = vmatpush1.msra.mxu0 %v218
      %268 = vmatprep.subr.mxu0 0.0
      %269 = vmatpush1.msra.mxu0 %v219
      %270 = vmatprep.subr.mxu0 0.0
      %271 = vmatpush1.msra.mxu0 %v220
      %272 = vmatprep.subr.mxu0 0.0
      %273 = vmatpush1.msra.mxu0 %v221
      %274 = vmatprep.subr.mxu0 0.0
      %275 = vmatpush1.msra.mxu0 %v222
      %276 = vmatprep.subr.mxu0 0.0
      %277 = vmatpush1.msra.mxu0 %v223
      %278 = vmatprep.subr.mxu0 0.0
      %279 = vmatpush1.msra.mxu0 %v224
      %280 = vmatprep.subr.mxu0 0.0
      %281 = vmatpush1.msra.mxu0 0.0
      %282 = vmatprep.subr.mxu0 0.0
      %283 = vmatpush1.msra.mxu0 0.0
      %284 = vmatprep.subr.mxu0 0.0
      %285 = vmatpush1.msra.mxu0 0.0
      %286 = vmatprep.subr.mxu0 0.0
      %287 = vmatpush1.msra.mxu0 0.0
      %288 = vmatprep.subr.mxu0 0.0
      %289 = vmatpush1.msra.mxu0 0.0
      %290 = vmatprep.subr.mxu0 0.0
      %291 = vmatpush1.msra.mxu0 0.0
      %292 = vmatprep.subr.mxu0 0.0
      %293 = vmatpush1.msra.mxu0 0.0
      %294 = vmatprep.subr.mxu0 0.0
      %295 = vmatpush1.msra.mxu0 0.0
      %296 = vmatprep.subr.mxu0 0.0
      %297 = vmatpush1.msra.mxu0 0.0
      %298 = vmatprep.subr.mxu0 0.0
      %299 = vmatpush1.msra.mxu0 0.0
      %300 = vmatprep.subr.mxu0 0.0
      %301 = vmatpush1.msra.mxu0 0.0
      %302 = vmatprep.subr.mxu0 0.0
      %303 = vmatpush1.msra.mxu0 0.0
      %304 = vmatprep.subr.mxu0 0.0
      %305 = vmatpush1.msra.mxu0 0.0
      %306 = vmatprep.subr.mxu0 0.0
      %307 = vmatpush1.msra.mxu0 0.0
      %308 = vmatprep.subr.mxu0 0.0
      %309 = vmatpush1.msra.mxu0 0.0
      %310 = vmatprep.subr.mxu0 0.0
      %311 = vmatpush1.msra.mxu0 0.0
      %312 = vmatprep.subr.mxu0 0.0
      %313 = vmatpush1.msra.mxu0 0.0
      %314 = vmatprep.subr.mxu0 0.0
      %315 = vmatpush1.msra.mxu0 0.0
      %316 = vmatprep.subr.mxu0 0.0
      %317 = vmatpush1.msra.mxu0 0.0
      %318 = vmatprep.subr.mxu0 0.0
      %319 = vmatpush1.msra.mxu0 0.0
      %320 = vmatprep.subr.mxu0 0.0
      %321 = vmatpush1.msra.mxu0 0.0
      %322 = vmatprep.subr.mxu0 0.0
      %323 = vmatpush1.msra.mxu0 0.0
      %324 = vmatprep.subr.mxu0 0.0
      %325 = vmatpush1.msra.mxu0 0.0
      %326 = vmatprep.mubr.f32.mxu0 0.0
      %327 = vmatmul.mubr.f32.gmra.mrb[0].mxu0 %v251
      %v328 = vpop.f32.mrb[0].mxu0
      %v329 = vadd.f32 %v232, %v328
      %v330 = vpop.f32.mrb[0].mxu0
      %331 = vmatprep.mubr.f32.mxu0 0.0
      %332 = vmatmul.mubr.f32.gmra.mrb[0].mxu0 %v254
      %v333 = vpop.f32.mrb[0].mxu0
      %v334 = vadd.f32 %v237, %v333
      %v335 = vpop.f32.mrb[0].mxu0
      %336 = vmatprep.mubr.f32.mxu0 0.0
      %337 = vmatmul.mubr.f32.gmra.mrb[0].mxu0 %v257
      %v338 = vpop.f32.mrb[0].mxu0
      %v339 = vadd.f32 %v242, %v338
      %v340 = vpop.f32.mrb[0].mxu0
      %341 = vmatprep.mubr.f32.mxu0 0.0
      %342 = vmatmul.mubr.f32.gmra.mrb[0].mxu0 %v260
      %v343 = vpop.f32.mrb[0].mxu0
      %v344 = vadd.f32 %v247, %v343
      %v345 = vpop.f32.mrb[0].mxu0
      %346 = vdwg.mxu0
      %v347 = vmul.f32 %v329, 0.5
      %v348 = vmul.f32 %v334, 0.5
      %v349 = vmul.f32 %v339, 0.5
      %v350 = vtanh.pop %v347
      %v351 = vtanh.pop %v348
      %v352 = vtanh.pop %v349
      %v353 = vmul.f32 %v350, 0.5
      %v354 = vadd.f32 %v353, 0.5
      %v355 = vmul.f32 %v351, 0.5
      %v356 = vadd.f32 %v355, 0.5
      %v357 = vmul.f32 %v352, 0.5
      %v358 = vadd.f32 %v357, 0.5
      %v359 = vtanh.pop %v344
      %v360 = vmul.f32 %v356, 0.0
      %v361 = vmul.f32 %v354, %v359
      %v362 = vadd.f32 %v360, %v361
      %v363 = vtanh.pop %v362
      %v364 = vmul.f32 %v358, %v363
      %vm365 = vcmask 261120
      %366 = vst.msk [vmem:[%s197] sm:$0xff] %vm365, %v364
      %368 = vrot.lane.b32.xlu0 %v364, 9
      %v369 = vpop.permute.xlu0 %368
      %vm371 = vcmask 72704
      %v372 = vsel %vm371, 0.0, %v369
      %vm373 = vcmp.ge.s32.totalorder %v211, 1
      %v374 = vsel %vm373, %v372, 0.0
      %375 = vrot.lane.b32.xlu0 %v364, 8
      %v376 = vpop.permute.xlu0 %375
      %vm378 = vcmask 64512
      %v379 = vsel %vm378, 0.0, %v376
      %380 = vrot.lane.b32.xlu0 %v364, 7
      %v381 = vpop.permute.xlu0 %380
      %vm383 = vcmask 56320
      %v384 = vsel %vm383, 0.0, %v381
      %vm385 = vcmp.lt.s32.totalorder %v211, 7
      %v386 = vsel %vm385, %v384, 0.0
      %387 = vrot.lane.b32.xlu0 %v364, 1
      %v388 = vpop.permute.xlu0 %387
      %vm390 = vcmask 7168
      %v391 = vsel %vm390, 0.0, %v388
      %v392 = vsel %vm373, %v391, 0.0
      %393 = vrot.lane.b32.xlu0 %v364, 127
      %v394 = vpop.permute.xlu0 %393
      %vm396 = vcmask 252928
      %v397 = vsel %vm396, %v394, 0.0
      %v398 = vsel %vm385, %v397, 0.0
      %399 = vrot.lane.b32.xlu0 %v364, 121
      %v400 = vpop.permute.xlu0 %399
      %vm402 = vcmask 203776
      %v403 = vsel %vm402, %v400, 0.0
      %v404 = vsel %vm373, %v403, 0.0
      %405 = vrot.lane.b32.xlu0 %v364, 120
      %v406 = vpop.permute.xlu0 %405
      %vm408 = vcmask 195584
      %v409 = vsel %vm408, %v406, 0.0
      %410 = vrot.lane.b32.xlu0 %v364, 119
      %v411 = vpop.permute.xlu0 %410
      %vm413 = vcmask 187392
      %v414 = vsel %vm413, %v411, 0.0
      %v415 = vsel %vm385, %v414, 0.0
      %v416 = vld [vmem:[%s2] sm:$0xff]
      %v417 = vld [vmem:[%s2 + $0x8] sm:$0xff]
      %v418 = vld [vmem:[%s2 + $0x10] sm:$0xff]
      %v419 = vld [vmem:[%s2 + $0x18] sm:$0xff]
      %v421 = vsel %vm249, %v416, 0
      %v424 = vsel %vm249, %v417, 0
      %v427 = vsel %vm249, %v418, 0
      %v430 = vsel %vm249, %v419, 0
      %432 = vmatprep.subr.mxu0 0.0
      %433 = vmatpush1.msra.mxu0 %v374
      %434 = vmatprep.subr.mxu0 0.0
      %435 = vmatpush1.msra.mxu0 %v379
      %436 = vmatprep.subr.mxu0 0.0
      %437 = vmatpush1.msra.mxu0 %v386
      %438 = vmatprep.subr.mxu0 0.0
      %439 = vmatpush1.msra.mxu0 %v392
      %440 = vmatprep.subr.mxu0 0.0
      %441 = vmatpush1.msra.mxu0 %v364
      %442 = vmatprep.subr.mxu0 0.0
      %443 = vmatpush1.msra.mxu0 %v398
      %444 = vmatprep.subr.mxu0 0.0
      %445 = vmatpush1.msra.mxu0 %v404
      %446 = vmatprep.subr.mxu0 0.0
      %447 = vmatpush1.msra.mxu0 %v409
      %448 = vmatprep.subr.mxu0 0.0
      %449 = vmatpush1.msra.mxu0 %v415
      %450 = vmatprep.subr.mxu0 0.0
      %451 = vmatpush1.msra.mxu0 0.0
      %452 = vmatprep.subr.mxu0 0.0
      %453 = vmatpush1.msra.mxu0 0.0
      %454 = vmatprep.subr.mxu0 0.0
      %455 = vmatpush1.msra.mxu0 0.0
      %456 = vmatprep.subr.mxu0 0.0
      %457 = vmatpush1.msra.mxu0 0.0
      %458 = vmatprep.subr.mxu0 0.0
      %459 = vmatpush1.msra.mxu0 0.0
      %460 = vmatprep.subr.mxu0 0.0
      %461 = vmatpush1.msra.mxu0 0.0
      %462 = vmatprep.subr.mxu0 0.0
      %463 = vmatpush1.msra.mxu0 0.0
      %464 = vmatprep.subr.mxu0 0.0
      %465 = vmatpush1.msra.mxu0 0.0
      %466 = vmatprep.subr.mxu0 0.0
      %467 = vmatpush1.msra.mxu0 0.0
      %468 = vmatprep.subr.mxu0 0.0
      %469 = vmatpush1.msra.mxu0 0.0
      %470 = vmatprep.subr.mxu0 0.0
      %471 = vmatpush1.msra.mxu0 0.0
      %472 = vmatprep.subr.mxu0 0.0
      %473 = vmatpush1.msra.mxu0 0.0
      %474 = vmatprep.subr.mxu0 0.0
      %475 = vmatpush1.msra.mxu0 0.0
      %476 = vmatprep.subr.mxu0 0.0
      %477 = vmatpush1.msra.mxu0 0.0
      %478 = vmatprep.subr.mxu0 0.0
      %479 = vmatpush1.msra.mxu0 0.0
      %480 = vmatprep.subr.mxu0 0.0
      %481 = vmatpush1.msra.mxu0 0.0
      %482 = vmatprep.subr.mxu0 0.0
      %483 = vmatpush1.msra.mxu0 0.0
      %484 = vmatprep.subr.mxu0 0.0
      %485 = vmatpush1.msra.mxu0 0.0
      %486 = vmatprep.subr.mxu0 0.0
      %487 = vmatpush1.msra.mxu0 0.0
      %488 = vmatprep.subr.mxu0 0.0
      %489 = vmatpush1.msra.mxu0 0.0
      %490 = vmatprep.subr.mxu0 0.0
      %491 = vmatpush1.msra.mxu0 0.0
      %492 = vmatprep.subr.mxu0 0.0
      %493 = vmatpush1.msra.mxu0 0.0
      %494 = vmatprep.subr.mxu0 0.0
      %495 = vmatpush1.msra.mxu0 0.0
      %496 = vmatprep.mubr.f32.mxu0 0.0
      %497 = vmatmul.mubr.f32.gmra.mrb[0].mxu0 %v421
      %v498 = vpop.f32.mrb[0].mxu0
      %v499 = vadd.f32 0.0, %v498
      %v500 = vpop.f32.mrb[0].mxu0
      %501 = vmatprep.mubr.f32.mxu0 0.0
      %502 = vmatmul.mubr.f32.gmra.mrb[0].mxu0 %v424
      %v503 = vpop.f32.mrb[0].mxu0
      %v504 = vadd.f32 0.0, %v503
      %v505 = vpop.f32.mrb[0].mxu0
      %506 = vmatprep.mubr.f32.mxu0 0.0
      %507 = vmatmul.mubr.f32.gmra.mrb[0].mxu0 %v427
      %v508 = vpop.f32.mrb[0].mxu0
      %v509 = vadd.f32 0.0, %v508
      %v510 = vpop.f32.mrb[0].mxu0
      %511 = vmatprep.mubr.f32.mxu0 0.0
      %512 = vmatmul.mubr.f32.gmra.mrb[0].mxu0 %v430
      %v513 = vpop.f32.mrb[0].mxu0
      %v514 = vadd.f32 0.0, %v513
      %v515 = vpop.f32.mrb[0].mxu0
      %516 = vdwg.mxu0
      %521 = vrot.lane.b32.xlu0 %v499, 32
      %v522 = vpop.permute.xlu0 %521
      %523 = vrot.lane.b32.xlu0 %v504, 32
      %v524 = vpop.permute.xlu0 %523
      %525 = vrot.lane.b32.xlu0 %v509, 32
      %v526 = vpop.permute.xlu0 %525
      %527 = vrot.lane.b32.xlu0 %v514, 32
      %v528 = vpop.permute.xlu0 %527
      %v533 = vadd.f32 %v329, %v522
      %v534 = vadd.f32 %v334, %v524
      %v535 = vadd.f32 %v339, %v526
      %v536 = vadd.f32 %v344, %v528
      %v537 = vmul.f32 %v533, 0.5
      %v538 = vmul.f32 %v534, 0.5
      %v539 = vmul.f32 %v535, 0.5
      %v540 = vtanh.pop %v537
      %v541 = vtanh.pop %v538
      %v542 = vtanh.pop %v539
      %v543 = vmul.f32 %v540, 0.5
      %v544 = vadd.f32 %v543, 0.5
      %v545 = vmul.f32 %v541, 0.5
      %v546 = vadd.f32 %v545, 0.5
      %v547 = vmul.f32 %v542, 0.5
      %v548 = vadd.f32 %v547, 0.5
      %v549 = vtanh.pop %v536
      %551 = vrot.lane.b32.xlu0 %v362, 32
      %v552 = vpop.permute.xlu0 %551
      %v554 = vmul.f32 %v546, %v552
      %v555 = vmul.f32 %v544, %v549
      %v556 = vadd.f32 %v554, %v555
      %v557 = vtanh.pop %v556
      %v558 = vmul.f32 %v548, %v557
      %560 = vrot.lane.b32.xlu0 %v558, 96
      %v561 = vpop.permute.xlu0 %560
      %s563 = scalar_lea.vmem %s197, 8
      %564 = vst.msk [vmem:[%s563] sm:$0xff] %vm365, %v561
      %p565 = scmp.lt.s32.totalorder %s15, 1
      %s566 = scalar_select %p565, %s15, 1
      %s567 = smul.addr %s566, 2
      %s568 = smul.addr %s567, 8
      %s569 = scalar_lea.vmem %s4, %s568
      // Predicated region
      $region37: #{net_forward.4} parent=35 // pred_check
        %p570 = pneg %p122
      $region38: #{net_forward.4} parent=35 // pred_check_branch
        %572 = sbr.rel (%p570) target = $region40
      $region39: #{net_forward.4} parent=35 // pred_region
        _
      $region40: #{net_forward.4} parent=35 // pred_fallthru
        _
    $region36: #{net_forward.4} parent=5 // pred_fallthru
      _
    %p573 = scmp.le.s32.totalorder 2, %s10
    // Predicated region
    $region41: #{net_forward.4} parent=5 // pred_check
      %p574 = pneg %p573
    $region42: #{net_forward.4} parent=5 // pred_check_branch
      %576 = sbr.rel (%p574) target = $region44
    $region43: #{net_forward.4} parent=5 // pred_region
      %s577 = ssub.s32 %s10, 2
      // Predicated region
      $region45: #{net_forward.4} parent=43 // pred_check
        %p578 = pneg %p128
      $region46: #{net_forward.4} parent=43 // pred_check_branch
        %580 = sbr.rel (%p578) target = $region48
      $region47: #{net_forward.4} parent=43 // pred_region
        %p581 = scmp.lt.s32.totalorder %s16, 1
        %s582 = scalar_select %p581, %s16, 1
        %s583 = smul.addr %s582, 2
        %s584 = smul.addr %s583, 8
        %s585 = scalar_lea.vmem %s4, %s584
      $region48: #{net_forward.4} parent=43 // pred_fallthru
        _
    $region44: #{net_forward.4} parent=5 // pred_fallthru
      _
  $region6: #{net_forward.4} parent=0 // loop_footer
    %s14 = sadd.s32 1, %s10
  $region7: #{net_forward.4} parent=0 // loop_footer_branch
    %9 = sbr.rel target = $region3
  $region8: #{net_forward.4} parent=0 // loop_exit
    _

// kernel: net_forward.5
$region0: #{net_forward.5}
  #allocation0 [shape = 'u32[]', space=smem, size = 0x4, offset = 0x4, fixed_abs, tag = 'smem constant byte address 0x4 - core index']
  #allocation1 [shape = 'u32[144,128]{1,0:T(1,128)}', space=vmem, size = 0x12000, scoped, tag = 'internal scratch']
  %s0 = inlined_call_operand.vmem [shape: f32[2,64], index: 0, kind: input, shape index: {}]
  %s1 = inlined_call_operand.vmem [shape: f32[64,16], index: 1, kind: input, shape index: {}]
  %s2 = inlined_call_operand.vmem [shape: f32[1,16], index: 2, kind: input, shape index: {}]
  %s3 = inlined_call_operand.vmem [shape: f32[16,16], index: 3, kind: input, shape index: {}]
  %s4 = inlined_call_operand.vmem [shape: f32[1,16], index: 4, kind: input, shape index: {}]
  %s5 = inlined_call_operand.vmem [shape: f32[16,12], index: 5, kind: input, shape index: {}]
  %s6 = inlined_call_operand.vmem [shape: f32[1,12], index: 6, kind: input, shape index: {}]
  %s7 = inlined_call_operand.hbm [shape: f32[2,12], index: 7, kind: output, shape index: {}]
  %s8 = sld [smem:[#allocation0]]
  $region38: #{net_forward.5} parent=0
    _
  %s10 = ssub.s32 1, %s8
  %s11 = scalar_select 0, %s10, %s8
  $region1: #{net_forward.5} parent=0
    #allocation2 [shape = 'u8[1024]{0}', space=vmem, size = 0x400, scoped, tag = 'output window, operand 0, single buffered']
    #allocation3 [shape = 's32[1]{0}', space=sflag, size = 0x4, scoped, tag = 'scoped memory for net_forward.5']
    %12 = vsyncpa [#allocation3], 0
    // Predicated region
    $region2: #{net_forward.5} parent=1 // pred_check
      _
    $region3: #{net_forward.5} parent=1 // pred_check_branch
      %14 = sbr.rel (0) target = $region5
    $region4: #{net_forward.5} parent=1 // pred_region
      _
    $region5: #{net_forward.5} parent=1 // pred_fallthru
      _
    // Predicated region
    $region6: #{net_forward.5} parent=1 // pred_check
      _
    $region7: #{net_forward.5} parent=1 // pred_check_branch
      %16 = sbr.rel (0) target = $region9
    $region8: #{net_forward.5} parent=1 // pred_region
      _
    $region9: #{net_forward.5} parent=1 // pred_fallthru
      _
    // Predicated region
    $region10: #{net_forward.5} parent=1 // pred_check
      _
    $region11: #{net_forward.5} parent=1 // pred_check_branch
      %18 = sbr.rel (0) target = $region13
    $region12: #{net_forward.5} parent=1 // pred_region
      _
    $region13: #{net_forward.5} parent=1 // pred_fallthru
      _
    // Predicated region
    $region14: #{net_forward.5} parent=1 // pred_check
      _
    $region15: #{net_forward.5} parent=1 // pred_check_branch
      %20 = sbr.rel (0) target = $region17
    $region16: #{net_forward.5} parent=1 // pred_region
      _
    $region17: #{net_forward.5} parent=1 // pred_fallthru
      _
    // Predicated region
    $region18: #{net_forward.5} parent=1 // pred_check
      _
    $region19: #{net_forward.5} parent=1 // pred_check_branch
      %22 = sbr.rel (0) target = $region21
    $region20: #{net_forward.5} parent=1 // pred_region
      _
    $region21: #{net_forward.5} parent=1 // pred_fallthru
      _
    // Predicated region
    $region22: #{net_forward.5} parent=1 // pred_check
      _
    $region23: #{net_forward.5} parent=1 // pred_check_branch
      %24 = sbr.rel (0) target = $region25
    $region24: #{net_forward.5} parent=1 // pred_region
      _
    $region25: #{net_forward.5} parent=1 // pred_fallthru
      _
    // Predicated region
    $region26: #{net_forward.5} parent=1 // pred_check
      _
    $region27: #{net_forward.5} parent=1 // pred_check_branch
      %26 = sbr.rel (0) target = $region29
    $region28: #{net_forward.5} parent=1 // pred_region
      _
    $region29: #{net_forward.5} parent=1 // pred_fallthru
      _
    %v27 = vld [vmem:[%s0] sm:$0x3]
    %v28 = vld [vmem:[%s1] sm:$0xff]
    %v29 = vld [vmem:[%s1 + $0x8] sm:$0xff]
    %v30 = vld [vmem:[%s1 + $0x10] sm:$0xff]
    %v31 = vld [vmem:[%s1 + $0x18] sm:$0xff]
    %v32 = vld [vmem:[%s1 + $0x20] sm:$0xff]
    %v33 = vld [vmem:[%s1 + $0x28] sm:$0xff]
    %v34 = vld [vmem:[%s1 + $0x30] sm:$0xff]
    %v35 = vld [vmem:[%s1 + $0x38] sm:$0xff]
    %v36 = vld [vmem:[%s2] sm:$0x1]
    %v38 = vlaneseq
    %v39 = vshrl.u32 %v38, 7
    %v40 = vsub.s32 0, %v39
    %v41 = vrot.slane %v36, %v40
    %vm43 = vcmask 523264
    %v45 = vsel %vm43, %v27, 0
    %47 = vmatprep.subr.mxu0 0.0
    %48 = vmatpush1.msra.mxu0 %v28
    %49 = vmatprep.subr.mxu0 0.0
    %50 = vmatpush1.msra.mxu0 %v29
    %51 = vmatprep.subr.mxu0 0.0
    %52 = vmatpush1.msra.mxu0 %v30
    %53 = vmatprep.subr.mxu0 0.0
    %54 = vmatpush1.msra.mxu0 %v31
    %55 = vmatprep.subr.mxu0 0.0
    %56 = vmatpush1.msra.mxu0 %v32
    %57 = vmatprep.subr.mxu0 0.0
    %58 = vmatpush1.msra.mxu0 %v33
    %59 = vmatprep.subr.mxu0 0.0
    %60 = vmatpush1.msra.mxu0 %v34
    %61 = vmatprep.subr.mxu0 0.0
    %62 = vmatpush1.msra.mxu0 %v35
    %63 = vmatprep.subr.mxu0 0.0
    %64 = vmatpush1.msra.mxu0 0.0
    %65 = vmatprep.subr.mxu0 0.0
    %66 = vmatpush1.msra.mxu0 0.0
    %67 = vmatprep.subr.mxu0 0.0
    %68 = vmatpush1.msra.mxu0 0.0
    %69 = vmatprep.subr.mxu0 0.0
    %70 = vmatpush1.msra.mxu0 0.0
    %71 = vmatprep.subr.mxu0 0.0
    %72 = vmatpush1.msra.mxu0 0.0
    %73 = vmatprep.subr.mxu0 0.0
    %74 = vmatpush1.msra.mxu0 0.0
    %75 = vmatprep.subr.mxu0 0.0
    %76 = vmatpush1.msra.mxu0 0.0
    %77 = vmatprep.subr.mxu0 0.0
    %78 = vmatpush1.msra.mxu0 0.0
    %79 = vmatprep.subr.mxu0 0.0
    %80 = vmatpush1.msra.mxu0 0.0
    %81 = vmatprep.subr.mxu0 0.0
    %82 = vmatpush1.msra.mxu0 0.0
    %83 = vmatprep.subr.mxu0 0.0
    %84 = vmatpush1.msra.mxu0 0.0
    %85 = vmatprep.subr.mxu0 0.0
    %86 = vmatpush1.msra.mxu0 0.0
    %87 = vmatprep.subr.mxu0 0.0
    %88 = vmatpush1.msra.mxu0 0.0
    %89 = vmatprep.subr.mxu0 0.0
    %90 = vmatpush1.msra.mxu0 0.0
    %91 = vmatprep.subr.mxu0 0.0
    %92 = vmatpush1.msra.mxu0 0.0
    %93 = vmatprep.subr.mxu0 0.0
    %94 = vmatpush1.msra.mxu0 0.0
    %95 = vmatprep.subr.mxu0 0.0
    %96 = vmatpush1.msra.mxu0 0.0
    %97 = vmatprep.subr.mxu0 0.0
    %98 = vmatpush1.msra.mxu0 0.0
    %99 = vmatprep.subr.mxu0 0.0
    %100 = vmatpush1.msra.mxu0 0.0
    %101 = vmatprep.subr.mxu0 0.0
    %102 = vmatpush1.msra.mxu0 0.0
    %103 = vmatprep.subr.mxu0 0.0
    %104 = vmatpush1.msra.mxu0 0.0
    %105 = vmatprep.subr.mxu0 0.0
    %106 = vmatpush1.msra.mxu0 0.0
    %107 = vmatprep.subr.mxu0 0.0
    %108 = vmatpush1.msra.mxu0 0.0
    %109 = vmatprep.subr.mxu0 0.0
    %110 = vmatpush1.msra.mxu0 0.0
    %111 = vmatprep.mubr.f32.mxu0 0.0
    %112 = vmatmul.mubr.f32.gmra.mrb[0].mxu0 %v45
    %v113 = vpop.f32.mrb[0].mxu0
    %v114 = vadd.f32 %v41, %v113
    %v115 = vpop.f32.mrb[0].mxu0
    %116 = vdwg.mxu0
    %vm117 = vcmp.gt.f32.partialorder %v114, 0.0
    %v118 = vmin.f32 %v114, 0.0
    %v119 = vmul.f32 %v118, 1.442695
    %v120 = vpow.pop %v119
    %v121 = vsub.f32 %v120, 1.0
    %v122 = vsel %vm117, %v114, %v121
    %v123 = vld [vmem:[%s3] sm:$0xff]
    %v124 = vld [vmem:[%s3 + $0x8] sm:$0xff]
    %v125 = vld [vmem:[%s4] sm:$0x1]
    %v127 = vlaneseq
    %v128 = vshrl.u32 %v127, 7
    %v129 = vsub.s32 0, %v128
    %v130 = vrot.slane %v125, %v129
    %vm132 = vcmask 130048
    %v134 = vsel %vm132, %v122, 0
    %136 = vmatprep.subr.mxu0 0.0
    %137 = vmatpush1.msra.mxu0 %v123
    %138 = vmatprep.subr.mxu0 0.0
    %139 = vmatpush1.msra.mxu0 %v124
    %140 = vmatprep.subr.mxu0 0.0
    %141 = vmatpush1.msra.mxu0 0.0
    %142 = vmatprep.subr.mxu0 0.0
    %143 = vmatpush1.msra.mxu0 0.0
    %144 = vmatprep.subr.mxu0 0.0
    %145 = vmatpush1.msra.mxu0 0.0
    %146 = vmatprep.subr.mxu0 0.0
    %147 = vmatpush1.msra.mxu0 0.0
    %148 = vmatprep.subr.mxu0 0.0
    %149 = vmatpush1.msra.mxu0 0.0
    %150 = vmatprep.subr.mxu0 0.0
    %151 = vmatpush1.msra.mxu0 0.0
    %152 = vmatprep.subr.mxu0 0.0
    %153 = vmatpush1.msra.mxu0 0.0
    %154 = vmatprep.subr.mxu0 0.0
    %155 = vmatpush1.msra.mxu0 0.0
    %156 = vmatprep.subr.mxu0 0.0
    %157 = vmatpush1.msra.mxu0 0.0
    %158 = vmatprep.subr.mxu0 0.0
    %159 = vmatpush1.msra.mxu0 0.0
    %160 = vmatprep.subr.mxu0 0.0
    %161 = vmatpush1.msra.mxu0 0.0
    %162 = vmatprep.subr.mxu0 0.0
    %163 = vmatpush1.msra.mxu0 0.0
    %164 = vmatprep.subr.mxu0 0.0
    %165 = vmatpush1.msra.mxu0 0.0
    %166 = vmatprep.subr.mxu0 0.0
    %167 = vmatpush1.msra.mxu0 0.0
    %168 = vmatprep.subr.mxu0 0.0
    %169 = vmatpush1.msra.mxu0 0.0
    %170 = vmatprep.subr.mxu0 0.0
    %171 = vmatpush1.msra.mxu0 0.0
    %172 = vmatprep.subr.mxu0 0.0
    %173 = vmatpush1.msra.mxu0 0.0
    %174 = vmatprep.subr.mxu0 0.0
    %175 = vmatpush1.msra.mxu0 0.0
    %176 = vmatprep.subr.mxu0 0.0
    %177 = vmatpush1.msra.mxu0 0.0
    %178 = vmatprep.subr.mxu0 0.0
    %179 = vmatpush1.msra.mxu0 0.0
    %180 = vmatprep.subr.mxu0 0.0
    %181 = vmatpush1.msra.mxu0 0.0
    %182 = vmatprep.subr.mxu0 0.0
    %183 = vmatpush1.msra.mxu0 0.0
    %184 = vmatprep.subr.mxu0 0.0
    %185 = vmatpush1.msra.mxu0 0.0
    %186 = vmatprep.subr.mxu0 0.0
    %187 = vmatpush1.msra.mxu0 0.0
    %188 = vmatprep.subr.mxu0 0.0
    %189 = vmatpush1.msra.mxu0 0.0
    %190 = vmatprep.subr.mxu0 0.0
    %191 = vmatpush1.msra.mxu0 0.0
    %192 = vmatprep.subr.mxu0 0.0
    %193 = vmatpush1.msra.mxu0 0.0
    %194 = vmatprep.subr.mxu0 0.0
    %195 = vmatpush1.msra.mxu0 0.0
    %196 = vmatprep.subr.mxu0 0.0
    %197 = vmatpush1.msra.mxu0 0.0
    %198 = vmatprep.subr.mxu0 0.0
    %199 = vmatpush1.msra.mxu0 0.0
    %200 = vmatprep.mubr.f32.mxu0 0.0
    %201 = vmatmul.mubr.f32.gmra.mrb[0].mxu0 %v134
    %v202 = vpop.f32.mrb[0].mxu0
    %v203 = vadd.f32 %v130, %v202
    %v204 = vpop.f32.mrb[0].mxu0
    %205 = vdwg.mxu0
    %vm206 = vcmp.gt.f32.partialorder %v203, 0.0
    %v207 = vmin.f32 %v203, 0.0
    %v208 = vmul.f32 %v207, 1.442695
    %v209 = vpow.pop %v208
    %v210 = vsub.f32 %v209, 1.0
    %v211 = vsel %vm206, %v203, %v210
    %v212 = vld [vmem:[%s5] sm:$0xff]
    %v213 = vld [vmem:[%s5 + $0x8] sm:$0xff]
    %v214 = vld [vmem:[%s6] sm:$0x1]
    %v216 = vlaneseq
    %v217 = vshrl.u32 %v216, 7
    %v218 = vsub.s32 0, %v217
    %v219 = vrot.slane %v214, %v218
    %v222 = vsel %vm132, %v211, 0
    %224 = vmatprep.subr.mxu0 0.0
    %225 = vmatpush1.msra.mxu0 %v212
    %226 = vmatprep.subr.mxu0 0.0
    %227 = vmatpush1.msra.mxu0 %v213
    %228 = vmatprep.subr.mxu0 0.0
    %229 = vmatpush1.msra.mxu0 0.0
    %230 = vmatprep.subr.mxu0 0.0
    %231 = vmatpush1.msra.mxu0 0.0
    %232 = vmatprep.subr.mxu0 0.0
    %233 = vmatpush1.msra.mxu0 0.0
    %234 = vmatprep.subr.mxu0 0.0
    %235 = vmatpush1.msra.mxu0 0.0
    %236 = vmatprep.subr.mxu0 0.0
    %237 = vmatpush1.msra.mxu0 0.0
    %238 = vmatprep.subr.mxu0 0.0
    %239 = vmatpush1.msra.mxu0 0.0
    %240 = vmatprep.subr.mxu0 0.0
    %241 = vmatpush1.msra.mxu0 0.0
    %242 = vmatprep.subr.mxu0 0.0
    %243 = vmatpush1.msra.mxu0 0.0
    %244 = vmatprep.subr.mxu0 0.0
    %245 = vmatpush1.msra.mxu0 0.0
    %246 = vmatprep.subr.mxu0 0.0
    %247 = vmatpush1.msra.mxu0 0.0
    %248 = vmatprep.subr.mxu0 0.0
    %249 = vmatpush1.msra.mxu0 0.0
    %250 = vmatprep.subr.mxu0 0.0
    %251 = vmatpush1.msra.mxu0 0.0
    %252 = vmatprep.subr.mxu0 0.0
    %253 = vmatpush1.msra.mxu0 0.0
    %254 = vmatprep.subr.mxu0 0.0
    %255 = vmatpush1.msra.mxu0 0.0
    %256 = vmatprep.subr.mxu0 0.0
    %257 = vmatpush1.msra.mxu0 0.0
    %258 = vmatprep.subr.mxu0 0.0
    %259 = vmatpush1.msra.mxu0 0.0
    %260 = vmatprep.subr.mxu0 0.0
    %261 = vmatpush1.msra.mxu0 0.0
    %262 = vmatprep.subr.mxu0 0.0
    %263 = vmatpush1.msra.mxu0 0.0
    %264 = vmatprep.subr.mxu0 0.0
    %265 = vmatpush1.msra.mxu0 0.0
    %266 = vmatprep.subr.mxu0 0.0
    %267 = vmatpush1.msra.mxu0 0.0
    %268 = vmatprep.subr.mxu0 0.0
    %269 = vmatpush1.msra.mxu0 0.0
    %270 = vmatprep.subr.mxu0 0.0
    %271 = vmatpush1.msra.mxu0 0.0
    %272 = vmatprep.subr.mxu0 0.0
    %273 = vmatpush1.msra.mxu0 0.0
    %274 = vmatprep.subr.mxu0 0.0
    %275 = vmatpush1.msra.mxu0 0.0
    %276 = vmatprep.subr.mxu0 0.0
    %277 = vmatpush1.msra.mxu0 0.0
    %278 = vmatprep.subr.mxu0 0.0
    %279 = vmatpush1.msra.mxu0 0.0
    %280 = vmatprep.subr.mxu0 0.0
    %281 = vmatpush1.msra.mxu0 0.0
    %282 = vmatprep.subr.mxu0 0.0
    %283 = vmatpush1.msra.mxu0 0.0
    %284 = vmatprep.subr.mxu0 0.0
    %285 = vmatpush1.msra.mxu0 0.0
    %286 = vmatprep.subr.mxu0 0.0
    %287 = vmatpush1.msra.mxu0 0.0
    %288 = vmatprep.mubr.f32.mxu0 0.0
    %289 = vmatmul.mubr.f32.gmra.mrb[0].mxu0 %v222
    %v290 = vpop.f32.mrb[0].mxu0
    %v291 = vadd.f32 %v219, %v290
    %v292 = vpop.f32.mrb[0].mxu0
    %293 = vdwg.mxu0
    %vm294 = vcmask 91136
    %295 = vst.msk [vmem:[#allocation2] sm:$0x3] %vm294, %v291
    // Predicated region
    $region30: #{net_forward.5} parent=1 // pred_check
      _
    $region31: #{net_forward.5} parent=1 // pred_check_branch
      %297 = sbr.rel (0) target = $region33
    $region32: #{net_forward.5} parent=1 // pred_region
      %s299 = ssub.s32 32, 32
      %300 = vsyncadd [#allocation3], %s299
      %s302 = sshll.u32 [#allocation2], 4
      %s303 = int_to_ptr.vmem [resolvable:$true] %s302
      %305 = dma.vmem_to_hbm [thread:$0]  %s303, 32, %s7, [#allocation3]
    $region33: #{net_forward.5} parent=1 // pred_fallthru
      _
    // Predicated region
    $region34: #{net_forward.5} parent=1 // pred_check
      _
    $region35: #{net_forward.5} parent=1 // pred_check_branch
      %307 = sbr.rel (0) target = $region37
    $region36: #{net_forward.5} parent=1 // pred_region
      %308 = dma.done [#allocation3], 32
    $region37: #{net_forward.5} parent=1 // pred_fallthru
      _
    %309 = vsyncpa [#allocation3], 1

</llo_original>
